<compile_context>
chip_gen: v6e
topology: v6e:2x2x1
jax: 0.10.0
libtpu: 0.0.40
codegen_flags: <defaults>
</compile_context>

<pallas_src>
import functools
import math

import jax
import jax.numpy as jnp
from jax.experimental import pallas as pl
from jax.experimental.pallas import tpu as pltpu

_EPS = 1e-5


def _ln_folded_kernel(x_ref, s_ref, b_ref, bw_ref, o_ref, *, inv_c):
    """Lane-dense path: each (tile, W=G*C) block holds G logical rows per vreg row.

    x_ref : (tile, W)  input block, W = G*C (multiple of 128)
    s_ref : (W, G)     selector, s[j, g] = 1.0 iff j // C == g         (group sums)
    b_ref : (G, W)     b[g, j]  = 1.0 iff j // C == g                  (broadcast)
    bw_ref: (G, W)     bw[g, j] = weight[j % C] iff j // C == g        (broadcast+scale)
    """
    x = x_ref[...].astype(jnp.float32)
    s = s_ref[...]
    hi = jax.lax.Precision.HIGHEST  # keep full f32 accuracy through the MXU

    # Two-pass variance: mean, broadcast back over each group's C lanes, center.
    sum_x = jax.lax.dot(x, s, precision=hi, preferred_element_type=jnp.float32)     # (tile, G)
    mu = sum_x * inv_c                                                               # (tile, G)
    mu_b = jax.lax.dot(mu, b_ref[...], precision=hi,
                       preferred_element_type=jnp.float32)                           # (tile, W)
    xc = x - mu_b
    sum_xc2 = jax.lax.dot(xc * xc, s, precision=hi,
                          preferred_element_type=jnp.float32)                        # (tile, G)
    var = sum_xc2 * inv_c                                                            # unbiased=False
    inv = jax.lax.rsqrt(var + _EPS)                                                  # (tile, G)

    # Broadcast 1/sigma back over each group's C lanes, fused with the weight.
    scale = jax.lax.dot(inv, bw_ref[...], precision=hi,
                        preferred_element_type=jnp.float32)                          # (tile, W)
    o_ref[...] = (x * scale).astype(o_ref.dtype)


def _ln_simple_kernel(x_ref, w_ref, o_ref):
    """Plain path (C already a multiple of 128, or tiny remainder / tiny tensors)."""
    x = x_ref[...].astype(jnp.float32)
    mu = jnp.mean(x, axis=-1, keepdims=True)
    xc = x - mu
    var = jnp.mean(xc * xc, axis=-1, keepdims=True)     # unbiased=False
    inv = jax.lax.rsqrt(var + _EPS)
    o_ref[...] = (x * inv * w_ref[...].astype(jnp.float32)).astype(o_ref.dtype)


def _budgets(target_block_bytes, dtype_bytes):
    """Return (target_block_bytes, vmem_limit_bytes), tuned per TPU generation."""
    if target_block_bytes is None:
        big_vmem = False
        try:
            info = pltpu.get_tpu_info()
            cap = getattr(info, "vmem_capacity_bytes", 0) or 0
            big_vmem = cap >= 96 * 1024 * 1024          # v5e / v6e: 128 MiB VMEM
        except Exception:
            big_vmem = False                            # unknown -> v7x-safe defaults
        target_block_bytes = (4 if big_vmem else 2) * 1024 * 1024
        vmem_limit = (64 if big_vmem else 32) * 1024 * 1024
    else:
        vmem_limit = min(64 * 1024 * 1024,
                         max(32 * 1024 * 1024, 12 * int(target_block_bytes)))
    # Sub-f32 inputs blow up to f32 temporaries in the kernel body: shrink the
    # HBM-side block so the in-VMEM f32 footprint stays roughly constant.
    if dtype_bytes < 4:
        target_block_bytes = max(512 * 1024, target_block_bytes * dtype_bytes // 4)
    return int(target_block_bytes), int(vmem_limit)


def _pick_tile(R, W, dtype_bytes, target_block_bytes):
    """Rows per block.

    * block ~ target_block_bytes (amortize the ~0.35us per-grid-step overhead)
    * but aim for >= 8 grid steps (>= 4 per v7x TensorCore) while blocks stay
      >= ~512 KiB, so DMA actually overlaps compute instead of being serialized
    * rounded to the dtype's sublane multiple (8 f32 / 16 bf16 / 32 int8)
    * nudged so the step count is even (the single 'parallel' grid axis is
      sharded across v7x's two TensorCores)
    """
    sub = max(8, 32 // max(dtype_bytes, 1))
    row_bytes = max(W * dtype_bytes, 1)

    tile = max(sub, target_block_bytes // row_bytes)
    min_tile = max(sub, (512 * 1024) // row_bytes)      # keep blocks >= ~512 KiB
    tile_for_steps = -(-R // 8)                         # ceil(R/8): >= 8 grid steps
    tile = min(tile, max(min_tile, tile_for_steps))
    tile = min(tile, R)
    if tile < R:
        tile = max(sub, (tile // sub) * sub)
    tile = min(tile, R)

    steps = -(-R // tile)
    if steps > 1 and steps % 2 == 1 and tile > sub:
        # Shrink a little (at most 2x) until the grid-step count is even.
        t, lo = tile, max(sub, tile // 2)
        while t - sub >= lo:
            t -= sub
            if (-(-R // t)) % 2 == 0:
                tile = t
                break
    return int(tile)


def _simple_call(x2d, weight, target_block_bytes, cparams, dtype_bytes):
    R, C = int(x2d.shape[0]), int(x2d.shape[1])
    tile = _pick_tile(R, C, dtype_bytes, target_block_bytes)
    cost = pl.CostEstimate(flops=8 * R * C, transcendentals=R,
                           bytes_accessed=2 * R * C * dtype_bytes)
    return pl.pallas_call(
        _ln_simple_kernel,
        out_shape=jax.ShapeDtypeStruct((R, C), x2d.dtype),
        grid_spec=pltpu.PrefetchScalarGridSpec(
            num_scalar_prefetch=0,
            grid=(pl.cdiv(R, tile),),
            in_specs=[
                pl.BlockSpec((tile, C), lambda i: (i, 0)),
                pl.BlockSpec((1, C), lambda i: (0, 0)),
            ],
            out_specs=pl.BlockSpec((tile, C), lambda i: (i, 0)),
        ),
        compiler_params=cparams,
        cost_estimate=cost,
    )(x2d, weight.reshape(1, C))


def _folded_call(x_main, weight, C, G, target_block_bytes, cparams, dtype_bytes):
    rows_main = int(x_main.shape[0])
    R, W = rows_main // G, G * C
    x_in = x_main.reshape(R, W)                 # row-major fold: no HBM copy
    tile = _pick_tile(R, W, dtype_bytes, target_block_bytes)

    group_ids = jnp.arange(W, dtype=jnp.int32) // C
    sel = (group_ids[:, None] == jnp.arange(G, dtype=jnp.int32)[None, :]
           ).astype(jnp.float32)                                        # (W, G)
    bsel = sel.T                                                        # (G, W)
    bw = bsel * jnp.tile(weight.astype(jnp.float32), G)[None, :]        # (G, W)

    cost = pl.CostEstimate(
        flops=rows_main * C * (8 + 8 * G),      # elementwise + selector matmuls (advisory)
        transcendentals=rows_main,
        bytes_accessed=2 * rows_main * C * dtype_bytes,
    )
    return pl.pallas_call(
        functools.partial(_ln_folded_kernel, inv_c=1.0 / C),
        out_shape=jax.ShapeDtypeStruct((R, W), x_main.dtype),
        grid_spec=pltpu.PrefetchScalarGridSpec(
            num_scalar_prefetch=0,
            grid=(pl.cdiv(R, tile),),
            in_specs=[
                pl.BlockSpec((tile, W), lambda i: (i, 0)),
                pl.BlockSpec((W, G), lambda i: (0, 0)),
                pl.BlockSpec((G, W), lambda i: (0, 0)),
                pl.BlockSpec((G, W), lambda i: (0, 0)),
            ],
            out_specs=pl.BlockSpec((tile, W), lambda i: (i, 0)),
        ),
        compiler_params=cparams,
        cost_estimate=cost,
    )(x_in, sel, bsel, bw)


def biasfree_layernorm(x, weight, *, target_block_bytes=None):
    """x: (..., C) array; weight: (C,). Returns same shape/dtype as x."""
    orig_shape = x.shape
    C = int(orig_shape[-1])
    assert weight.shape == (C,)

    x2d = x.reshape(-1, C)                      # free reshape, no HBM copy
    rows = int(x2d.shape[0])
    dtype_bytes = jnp.dtype(x.dtype).itemsize

    tbb, vmem_limit = _budgets(target_block_bytes, dtype_bytes)
    cparams = pltpu.CompilerParams(
        dimension_semantics=("parallel",),
        vmem_limit_bytes=vmem_limit,
    )

    # Smallest G such that G*C is a multiple of 128 lanes.
    G = 128 // math.gcd(C, 128)
    rows_main = (rows // G) * G if G > 1 else 0

    if G == 1 or rows_main == 0:
        # C already lane-dense (multiple of 128) or the tensor is tiny.
        return _simple_call(x2d, weight, tbb, cparams, dtype_bytes).reshape(orig_shape)

    out_main = _folded_call(x2d[:rows_main], weight, C, G, tbb, cparams, dtype_bytes)
    if rows_main == rows:
        return out_main.reshape(orig_shape)

    # Ragged row count: lane-dense folded kernel on the bulk, simple kernel on
    # the <=G-1 leftover rows (per-row op, so splitting is exact).
    out_rem = _simple_call(x2d[rows_main:], weight, tbb, cparams, dtype_bytes)
    out = jnp.concatenate([out_main.reshape(rows_main, C), out_rem], axis=0)
    return out.reshape(orig_shape)


def _reference(x, weight):
    x32 = x.astype(jnp.float32)
    var = jnp.var(x32, axis=-1, keepdims=True)          # ddof=0 (unbiased=False)
    return (x32 / jnp.sqrt(var + _EPS) * weight.astype(jnp.float32)).astype(x.dtype)


if __name__ == "__main__":
    key = jax.random.PRNGKey(0)
    k1, k2, k3, kw1, kw3 = jax.random.split(key, 5)

    # Restormer-style: B batches of N = H*W tokens with C channels (C=32 -> G=4).
    B, N, C = 2, 64, 32
    x = jax.random.normal(k1, (B, N, C), dtype=jnp.float32)
    # Parameter initialized as torch.ones(C); perturb so the fused-weight path
    # is actually exercised.
    w = (jnp.ones((C,), dtype=jnp.float32)
         + 0.1 * jax.random.normal(kw1, (C,), dtype=jnp.float32))
    out = jax.block_until_ready(biasfree_layernorm(x, w))
    ref = _reference(x, w)
    assert out.shape == x.shape and out.dtype == x.dtype
    assert jnp.allclose(out, ref, atol=2e-5, rtol=2e-5), "mismatch vs reference (folded)"

    # Fallback path: C already a multiple of 128 (lane-dense as-is).
    C2 = 128
    x2 = jax.random.normal(k2, (2, 8, C2), dtype=jnp.float32)
    w2 = jnp.ones((C2,), dtype=jnp.float32)
    out2 = jax.block_until_ready(biasfree_layernorm(x2, w2))
    assert jnp.allclose(out2, _reference(x2, w2), atol=2e-5, rtol=2e-5), \
        "mismatch vs reference (simple)"

    # Ragged row count: C=48 -> G=8; rows = 66 = 64 folded + 2 remainder rows.
    C3 = 48
    x3 = jax.random.normal(k3, (3, 22, C3), dtype=jnp.float32)
    w3 = (jnp.ones((C3,), dtype=jnp.float32)
          + 0.05 * jax.random.normal(kw3, (C3,), dtype=jnp.float32))
    out3 = jax.block_until_ready(biasfree_layernorm(x3, w3))
    assert jnp.allclose(out3, _reference(x3, w3), atol=2e-5, rtol=2e-5), \
        "mismatch vs reference (ragged split)"

    print("KERNEL_OK")
</pallas_src>

<mosaic_0001>
module attributes {stable_mosaic.version = 11 : i64} {
  func.func @_ln_folded_kernel(%arg0: i32, %arg1: memref<32x128xf32, #tpu.memory_space<vmem>>, %arg2: memref<128x4xf32, #tpu.memory_space<vmem>>, %arg3: memref<4x128xf32, #tpu.memory_space<vmem>>, %arg4: memref<4x128xf32, #tpu.memory_space<vmem>>, %arg5: memref<32x128xf32, #tpu.memory_space<vmem>>) attributes {dimension_semantics = [#tpu.dimension_semantics<parallel>], iteration_bounds = array<i64: 1>, scalar_prefetch = 0 : i64, scratch_operands = 0 : i64, tpu.core_type = #tpu.core_type<tc>, window_params = [{transform_indices = @transform_0, window_bounds = array<i64: 32, 128>}, {pipeline_mode = #tpu.pipeline_mode<synchronous>, transform_indices = @transform_1, window_bounds = array<i64: 128, 4>}, {pipeline_mode = #tpu.pipeline_mode<synchronous>, transform_indices = @transform_2, window_bounds = array<i64: 4, 128>}, {pipeline_mode = #tpu.pipeline_mode<synchronous>, transform_indices = @transform_3, window_bounds = array<i64: 4, 128>}, {transform_indices = @transform_4, window_bounds = array<i64: 32, 128>}]} {
    %c0 = arith.constant 0 : index
    %c0_0 = arith.constant 0 : index
    %0 = vector.load %arg1[%c0, %c0_0] : memref<32x128xf32, #tpu.memory_space<vmem>>, vector<32x128xf32>
    %c0_1 = arith.constant 0 : index
    %c0_2 = arith.constant 0 : index
    %1 = vector.load %arg2[%c0_1, %c0_2] : memref<128x4xf32, #tpu.memory_space<vmem>>, vector<128x4xf32>
    %cst = arith.constant dense<0.000000e+00> : vector<32x4xf32>
    %2 = tpu.matmul %0, %1, %cst {dimension_numbers = #tpu.dot_dimension_numbers<[1], [0], [0], [1], [0, 0, 1, 1], [], []>, precision = #tpu.contract_precision<fp32>} : vector<32x128xf32>, vector<128x4xf32>, vector<32x4xf32> -> vector<32x4xf32>
    %cst_3 = arith.constant 3.125000e-02 : f32
    %3 = vector.broadcast %cst_3 : f32 to vector<32x4xf32>
    %4 = arith.mulf %2, %3 : vector<32x4xf32>
    %c0_4 = arith.constant 0 : index
    %c0_5 = arith.constant 0 : index
    %5 = vector.load %arg3[%c0_4, %c0_5] : memref<4x128xf32, #tpu.memory_space<vmem>>, vector<4x128xf32>
    %cst_6 = arith.constant dense<0.000000e+00> : vector<32x128xf32>
    %6 = tpu.matmul %4, %5, %cst_6 {dimension_numbers = #tpu.dot_dimension_numbers<[1], [0], [0], [1], [0, 0, 1, 1], [], []>, precision = #tpu.contract_precision<fp32>} : vector<32x4xf32>, vector<4x128xf32>, vector<32x128xf32> -> vector<32x128xf32>
    %7 = arith.subf %0, %6 : vector<32x128xf32>
    %8 = arith.mulf %7, %7 : vector<32x128xf32>
    %cst_7 = arith.constant dense<0.000000e+00> : vector<32x4xf32>
    %9 = tpu.matmul %8, %1, %cst_7 {dimension_numbers = #tpu.dot_dimension_numbers<[1], [0], [0], [1], [0, 0, 1, 1], [], []>, precision = #tpu.contract_precision<fp32>} : vector<32x128xf32>, vector<128x4xf32>, vector<32x4xf32> -> vector<32x4xf32>
    %cst_8 = arith.constant 3.125000e-02 : f32
    %10 = vector.broadcast %cst_8 : f32 to vector<32x4xf32>
    %11 = arith.mulf %9, %10 : vector<32x4xf32>
    %cst_9 = arith.constant 9.99999974E-6 : f32
    %12 = vector.broadcast %cst_9 : f32 to vector<32x4xf32>
    %13 = arith.addf %11, %12 : vector<32x4xf32>
    %14 = math.rsqrt %13 : vector<32x4xf32>
    %c0_10 = arith.constant 0 : index
    %c0_11 = arith.constant 0 : index
    %15 = vector.load %arg4[%c0_10, %c0_11] : memref<4x128xf32, #tpu.memory_space<vmem>>, vector<4x128xf32>
    %cst_12 = arith.constant dense<0.000000e+00> : vector<32x128xf32>
    %16 = tpu.matmul %14, %15, %cst_12 {dimension_numbers = #tpu.dot_dimension_numbers<[1], [0], [0], [1], [0, 0, 1, 1], [], []>, precision = #tpu.contract_precision<fp32>} : vector<32x4xf32>, vector<4x128xf32>, vector<32x128xf32> -> vector<32x128xf32>
    %17 = arith.mulf %0, %16 : vector<32x128xf32>
    %c0_13 = arith.constant 0 : index
    %c0_14 = arith.constant 0 : index
    %18 = vector.load %arg5[%c0_13, %c0_14] : memref<32x128xf32, #tpu.memory_space<vmem>>, vector<32x128xf32>
    tpu.vector_store %arg5[%c0_13, %c0_14], %17 {strides = array<i32>} : memref<32x128xf32, #tpu.memory_space<vmem>>, vector<32x128xf32>,
    return
  }
  func.func @transform_0(%arg0: i32) -> (i32, i32) {
    %c0_i32 = arith.constant 0 : i32
    %c0_i32_0 = arith.constant 0 : i32
    return %arg0, %c0_i32 : i32, i32
  }
  func.func @transform_1(%arg0: i32) -> (i32, i32) {
    %c0_i32 = arith.constant 0 : i32
    %c0_i32_0 = arith.constant 0 : i32
    %c0_i32_1 = arith.constant 0 : i32
    return %c0_i32, %c0_i32_0 : i32, i32
  }
  func.func @transform_2(%arg0: i32) -> (i32, i32) {
    %c0_i32 = arith.constant 0 : i32
    %c0_i32_0 = arith.constant 0 : i32
    %c0_i32_1 = arith.constant 0 : i32
    return %c0_i32, %c0_i32_0 : i32, i32
  }
  func.func @transform_3(%arg0: i32) -> (i32, i32) {
    %c0_i32 = arith.constant 0 : i32
    %c0_i32_0 = arith.constant 0 : i32
    %c0_i32_1 = arith.constant 0 : i32
    return %c0_i32, %c0_i32_0 : i32, i32
  }
  func.func @transform_4(%arg0: i32) -> (i32, i32) {
    %c0_i32 = arith.constant 0 : i32
    %c0_i32_0 = arith.constant 0 : i32
    return %arg0, %c0_i32 : i32, i32
  }
}

</mosaic_0001>

<llo_original>
// kernel: tpu_custom_call.1
$region0: #{tpu_custom_call.1}
  #allocation0 [shape = 'u32[]', space=smem, size = 0x4, offset = 0x4, fixed_abs, tag = 'smem constant byte address 0x4 - core index']
  #allocation1 [shape = 'u32[144,128]{1,0:T(1,128)}', space=vmem, size = 0x12000, scoped, tag = 'internal scratch']
  %s0 = inlined_call_operand.vmem [shape: f32[32,128], index: 0, kind: input, shape index: {}]
  %s1 = inlined_call_operand.vmem [shape: f32[128,4], index: 1, kind: input, shape index: {}]
  %s2 = inlined_call_operand.vmem [shape: f32[4,128], index: 2, kind: input, shape index: {}]
  %s3 = inlined_call_operand.vmem [shape: f32[4,128], index: 3, kind: input, shape index: {}]
  %s4 = inlined_call_operand.hbm [shape: f32[32,128], index: 4, kind: output, shape index: {}]
  %s5 = sld [smem:[#allocation0]]
  $region26: #{tpu_custom_call.1} parent=0
    _
  %s7 = ssub.s32 1, %s5
  %s8 = scalar_select 0, %s7, %s5
  $region1: #{tpu_custom_call.1} parent=0
    #allocation2 [shape = 'u8[16384]{0}', space=vmem, size = 0x4000, scoped, tag = 'output window, operand 0, single buffered']
    #allocation3 [shape = 's32[1]{0}', space=sflag, size = 0x4, scoped, tag = 'scoped memory for tpu_custom_call.1']
    %9 = vsyncpa [#allocation3], 0
    // Predicated region
    $region2: #{tpu_custom_call.1} parent=1 // pred_check
      _
    $region3: #{tpu_custom_call.1} parent=1 // pred_check_branch
      %11 = sbr.rel (0) target = $region5
    $region4: #{tpu_custom_call.1} parent=1 // pred_region
      _
    $region5: #{tpu_custom_call.1} parent=1 // pred_fallthru
      _
    // Predicated region
    $region6: #{tpu_custom_call.1} parent=1 // pred_check
      _
    $region7: #{tpu_custom_call.1} parent=1 // pred_check_branch
      %13 = sbr.rel (0) target = $region9
    $region8: #{tpu_custom_call.1} parent=1 // pred_region
      _
    $region9: #{tpu_custom_call.1} parent=1 // pred_fallthru
      _
    // Predicated region
    $region10: #{tpu_custom_call.1} parent=1 // pred_check
      _
    $region11: #{tpu_custom_call.1} parent=1 // pred_check_branch
      %15 = sbr.rel (0) target = $region13
    $region12: #{tpu_custom_call.1} parent=1 // pred_region
      _
    $region13: #{tpu_custom_call.1} parent=1 // pred_fallthru
      _
    // Predicated region
    $region14: #{tpu_custom_call.1} parent=1 // pred_check
      _
    $region15: #{tpu_custom_call.1} parent=1 // pred_check_branch
      %17 = sbr.rel (0) target = $region17
    $region16: #{tpu_custom_call.1} parent=1 // pred_region
      _
    $region17: #{tpu_custom_call.1} parent=1 // pred_fallthru
      _
    %v18 = vld [vmem:[%s0] sm:$0xff]
    %v19 = vld [vmem:[%s0 + $0x8] sm:$0xff]
    %v20 = vld [vmem:[%s0 + $0x10] sm:$0xff]
    %v21 = vld [vmem:[%s0 + $0x18] sm:$0xff]
    %v22 = vld [vmem:[%s1] sm:$0xff]
    %v23 = vld [vmem:[%s1 + $0x8] sm:$0xff]
    %v24 = vld [vmem:[%s1 + $0x10] sm:$0xff]
    %v25 = vld [vmem:[%s1 + $0x18] sm:$0xff]
    %v26 = vld [vmem:[%s1 + $0x20] sm:$0xff]
    %v27 = vld [vmem:[%s1 + $0x28] sm:$0xff]
    %v28 = vld [vmem:[%s1 + $0x30] sm:$0xff]
    %v29 = vld [vmem:[%s1 + $0x38] sm:$0xff]
    %v30 = vld [vmem:[%s1 + $0x40] sm:$0xff]
    %v31 = vld [vmem:[%s1 + $0x48] sm:$0xff]
    %v32 = vld [vmem:[%s1 + $0x50] sm:$0xff]
    %v33 = vld [vmem:[%s1 + $0x58] sm:$0xff]
    %v34 = vld [vmem:[%s1 + $0x60] sm:$0xff]
    %v35 = vld [vmem:[%s1 + $0x68] sm:$0xff]
    %v36 = vld [vmem:[%s1 + $0x70] sm:$0xff]
    %v37 = vld [vmem:[%s1 + $0x78] sm:$0xff]
    %38 = vmatprep.subr.mxu0 0.0
    %v39 = vand.u32 %v37, 4294901760
    %40 = vmatpush1.msra.mxu0 %v39
    %41 = vmatprep.subr.mxu0 0.0
    %v42 = vand.u32 %v36, 4294901760
    %43 = vmatpush1.msra.mxu0 %v42
    %44 = vmatprep.subr.mxu0 0.0
    %v45 = vand.u32 %v35, 4294901760
    %46 = vmatpush1.msra.mxu0 %v45
    %47 = vmatprep.subr.mxu0 0.0
    %v48 = vand.u32 %v34, 4294901760
    %49 = vmatpush1.msra.mxu0 %v48
    %50 = vmatprep.subr.mxu0 0.0
    %v51 = vand.u32 %v33, 4294901760
    %52 = vmatpush1.msra.mxu0 %v51
    %53 = vmatprep.subr.mxu0 0.0
    %v54 = vand.u32 %v32, 4294901760
    %55 = vmatpush1.msra.mxu0 %v54
    %56 = vmatprep.subr.mxu0 0.0
    %v57 = vand.u32 %v31, 4294901760
    %58 = vmatpush1.msra.mxu0 %v57
    %59 = vmatprep.subr.mxu0 0.0
    %v60 = vand.u32 %v30, 4294901760
    %61 = vmatpush1.msra.mxu0 %v60
    %62 = vmatprep.subr.mxu0 0.0
    %v63 = vand.u32 %v29, 4294901760
    %64 = vmatpush1.msra.mxu0 %v63
    %65 = vmatprep.subr.mxu0 0.0
    %v66 = vand.u32 %v28, 4294901760
    %67 = vmatpush1.msra.mxu0 %v66
    %68 = vmatprep.subr.mxu0 0.0
    %v69 = vand.u32 %v27, 4294901760
    %70 = vmatpush1.msra.mxu0 %v69
    %71 = vmatprep.subr.mxu0 0.0
    %v72 = vand.u32 %v26, 4294901760
    %73 = vmatpush1.msra.mxu0 %v72
    %74 = vmatprep.subr.mxu0 0.0
    %v75 = vand.u32 %v25, 4294901760
    %76 = vmatpush1.msra.mxu0 %v75
    %77 = vmatprep.subr.mxu0 0.0
    %v78 = vand.u32 %v24, 4294901760
    %79 = vmatpush1.msra.mxu0 %v78
    %80 = vmatprep.subr.mxu0 0.0
    %v81 = vand.u32 %v23, 4294901760
    %82 = vmatpush1.msra.mxu0 %v81
    %83 = vmatprep.subr.mxu0 0.0
    %v84 = vand.u32 %v22, 4294901760
    %85 = vmatpush1.msra.mxu0 %v84
    %86 = vmatprep.subr.mxu0 0.0
    %87 = vmatpush2.msra.mxu0 0.0
    %88 = vmatprep.subr.mxu0 0.0
    %89 = vmatpush2.msra.mxu0 0.0
    %90 = vmatprep.subr.mxu0 0.0
    %91 = vmatpush2.msra.mxu0 0.0
    %92 = vmatprep.subr.mxu0 0.0
    %93 = vmatpush2.msra.mxu0 0.0
    %94 = vmatprep.subr.mxu0 0.0
    %95 = vmatpush2.msra.mxu0 0.0
    %96 = vmatprep.subr.mxu0 0.0
    %97 = vmatpush2.msra.mxu0 0.0
    %98 = vmatprep.subr.mxu0 0.0
    %99 = vmatpush2.msra.mxu0 0.0
    %100 = vmatprep.subr.mxu0 0.0
    %101 = vmatpush2.msra.mxu0 0.0
    %102 = vmatprep.subr.mxu0 0.0
    %103 = vmatpush2.msra.mxu0 0.0
    %104 = vmatprep.subr.mxu0 0.0
    %105 = vmatpush2.msra.mxu0 0.0
    %106 = vmatprep.subr.mxu0 0.0
    %107 = vmatpush2.msra.mxu0 0.0
    %108 = vmatprep.subr.mxu0 0.0
    %109 = vmatpush2.msra.mxu0 0.0
    %110 = vmatprep.subr.mxu0 0.0
    %111 = vmatpush2.msra.mxu0 0.0
    %112 = vmatprep.subr.mxu0 0.0
    %113 = vmatpush2.msra.mxu0 0.0
    %114 = vmatprep.subr.mxu0 0.0
    %115 = vmatpush2.msra.mxu0 0.0
    %116 = vmatprep.subr.mxu0 0.0
    %117 = vmatpush2.msra.mxu0 0.0
    %118 = vmatprep.mubr.f32.mxu0 0.0
    %v119 = vand.u32 %v18, 4294901760
    %v120 = vsub.f32 %v18, %v119
    %v121 = vand.u32 %v120, 4294901760
    %v122 = vsub.f32 %v120, %v121
    %v123 = vand.u32 %v122, 4294901760
    %124 = vmatmul.mubr.f32.gmra.mxu0 %v123
    %v125 = vpop.f32.mrf.mxu0
    %v126 = vadd.f32 0.0, %v125
    %v127 = vpop.f32.mrf.mxu0
    %128 = vmatprep.mubr.f32.mxu0 0.0
    %v129 = vand.u32 %v19, 4294901760
    %v130 = vsub.f32 %v19, %v129
    %v131 = vand.u32 %v130, 4294901760
    %v132 = vsub.f32 %v130, %v131
    %v133 = vand.u32 %v132, 4294901760
    %134 = vmatmul.mubr.f32.gmra.mxu0 %v133
    %v135 = vpop.f32.mrf.mxu0
    %v136 = vadd.f32 0.0, %v135
    %v137 = vpop.f32.mrf.mxu0
    %138 = vmatprep.mubr.f32.mxu0 0.0
    %v139 = vand.u32 %v20, 4294901760
    %v140 = vsub.f32 %v20, %v139
    %v141 = vand.u32 %v140, 4294901760
    %v142 = vsub.f32 %v140, %v141
    %v143 = vand.u32 %v142, 4294901760
    %144 = vmatmul.mubr.f32.gmra.mxu0 %v143
    %v145 = vpop.f32.mrf.mxu0
    %v146 = vadd.f32 0.0, %v145
    %v147 = vpop.f32.mrf.mxu0
    %148 = vmatprep.mubr.f32.mxu0 0.0
    %v149 = vand.u32 %v21, 4294901760
    %v150 = vsub.f32 %v21, %v149
    %v151 = vand.u32 %v150, 4294901760
    %v152 = vsub.f32 %v150, %v151
    %v153 = vand.u32 %v152, 4294901760
    %154 = vmatmul.mubr.f32.gmra.mxu0 %v153
    %v155 = vpop.f32.mrf.mxu0
    %v156 = vadd.f32 0.0, %v155
    %v157 = vpop.f32.mrf.mxu0
    %158 = vdwg.mxu0
    %159 = vmatprep.subr.mxu0 0.0
    %v160 = vand.u32 %v37, 4294901760
    %v161 = vsub.f32 %v37, %v160
    %v162 = vand.u32 %v161, 4294901760
    %v163 = vsub.f32 %v161, %v162
    %v164 = vand.u32 %v163, 4294901760
    %165 = vmatpush1.msra.mxu0 %v164
    %166 = vmatprep.subr.mxu0 0.0
    %v167 = vand.u32 %v36, 4294901760
    %v168 = vsub.f32 %v36, %v167
    %v169 = vand.u32 %v168, 4294901760
    %v170 = vsub.f32 %v168, %v169
    %v171 = vand.u32 %v170, 4294901760
    %172 = vmatpush1.msra.mxu0 %v171
    %173 = vmatprep.subr.mxu0 0.0
    %v174 = vand.u32 %v35, 4294901760
    %v175 = vsub.f32 %v35, %v174
    %v176 = vand.u32 %v175, 4294901760
    %v177 = vsub.f32 %v175, %v176
    %v178 = vand.u32 %v177, 4294901760
    %179 = vmatpush1.msra.mxu0 %v178
    %180 = vmatprep.subr.mxu0 0.0
    %v181 = vand.u32 %v34, 4294901760
    %v182 = vsub.f32 %v34, %v181
    %v183 = vand.u32 %v182, 4294901760
    %v184 = vsub.f32 %v182, %v183
    %v185 = vand.u32 %v184, 4294901760
    %186 = vmatpush1.msra.mxu0 %v185
    %187 = vmatprep.subr.mxu0 0.0
    %v188 = vand.u32 %v33, 4294901760
    %v189 = vsub.f32 %v33, %v188
    %v190 = vand.u32 %v189, 4294901760
    %v191 = vsub.f32 %v189, %v190
    %v192 = vand.u32 %v191, 4294901760
    %193 = vmatpush1.msra.mxu0 %v192
    %194 = vmatprep.subr.mxu0 0.0
    %v195 = vand.u32 %v32, 4294901760
    %v196 = vsub.f32 %v32, %v195
    %v197 = vand.u32 %v196, 4294901760
    %v198 = vsub.f32 %v196, %v197
    %v199 = vand.u32 %v198, 4294901760
    %200 = vmatpush1.msra.mxu0 %v199
    %201 = vmatprep.subr.mxu0 0.0
    %v202 = vand.u32 %v31, 4294901760
    %v203 = vsub.f32 %v31, %v202
    %v204 = vand.u32 %v203, 4294901760
    %v205 = vsub.f32 %v203, %v204
    %v206 = vand.u32 %v205, 4294901760
    %207 = vmatpush1.msra.mxu0 %v206
    %208 = vmatprep.subr.mxu0 0.0
    %v209 = vand.u32 %v30, 4294901760
    %v210 = vsub.f32 %v30, %v209
    %v211 = vand.u32 %v210, 4294901760
    %v212 = vsub.f32 %v210, %v211
    %v213 = vand.u32 %v212, 4294901760
    %214 = vmatpush1.msra.mxu0 %v213
    %215 = vmatprep.subr.mxu0 0.0
    %v216 = vand.u32 %v29, 4294901760
    %v217 = vsub.f32 %v29, %v216
    %v218 = vand.u32 %v217, 4294901760
    %v219 = vsub.f32 %v217, %v218
    %v220 = vand.u32 %v219, 4294901760
    %221 = vmatpush1.msra.mxu0 %v220
    %222 = vmatprep.subr.mxu0 0.0
    %v223 = vand.u32 %v28, 4294901760
    %v224 = vsub.f32 %v28, %v223
    %v225 = vand.u32 %v224, 4294901760
    %v226 = vsub.f32 %v224, %v225
    %v227 = vand.u32 %v226, 4294901760
    %228 = vmatpush1.msra.mxu0 %v227
    %229 = vmatprep.subr.mxu0 0.0
    %v230 = vand.u32 %v27, 4294901760
    %v231 = vsub.f32 %v27, %v230
    %v232 = vand.u32 %v231, 4294901760
    %v233 = vsub.f32 %v231, %v232
    %v234 = vand.u32 %v233, 4294901760
    %235 = vmatpush1.msra.mxu0 %v234
    %236 = vmatprep.subr.mxu0 0.0
    %v237 = vand.u32 %v26, 4294901760
    %v238 = vsub.f32 %v26, %v237
    %v239 = vand.u32 %v238, 4294901760
    %v240 = vsub.f32 %v238, %v239
    %v241 = vand.u32 %v240, 4294901760
    %242 = vmatpush1.msra.mxu0 %v241
    %243 = vmatprep.subr.mxu0 0.0
    %v244 = vand.u32 %v25, 4294901760
    %v245 = vsub.f32 %v25, %v244
    %v246 = vand.u32 %v245, 4294901760
    %v247 = vsub.f32 %v245, %v246
    %v248 = vand.u32 %v247, 4294901760
    %249 = vmatpush1.msra.mxu0 %v248
    %250 = vmatprep.subr.mxu0 0.0
    %v251 = vand.u32 %v24, 4294901760
    %v252 = vsub.f32 %v24, %v251
    %v253 = vand.u32 %v252, 4294901760
    %v254 = vsub.f32 %v252, %v253
    %v255 = vand.u32 %v254, 4294901760
    %256 = vmatpush1.msra.mxu0 %v255
    %257 = vmatprep.subr.mxu0 0.0
    %v258 = vand.u32 %v23, 4294901760
    %v259 = vsub.f32 %v23, %v258
    %v260 = vand.u32 %v259, 4294901760
    %v261 = vsub.f32 %v259, %v260
    %v262 = vand.u32 %v261, 4294901760
    %263 = vmatpush1.msra.mxu0 %v262
    %264 = vmatprep.subr.mxu0 0.0
    %v265 = vand.u32 %v22, 4294901760
    %v266 = vsub.f32 %v22, %v265
    %v267 = vand.u32 %v266, 4294901760
    %v268 = vsub.f32 %v266, %v267
    %v269 = vand.u32 %v268, 4294901760
    %270 = vmatpush1.msra.mxu0 %v269
    %271 = vmatprep.subr.mxu0 0.0
    %272 = vmatpush2.msra.mxu0 0.0
    %273 = vmatprep.subr.mxu0 0.0
    %274 = vmatpush2.msra.mxu0 0.0
    %275 = vmatprep.subr.mxu0 0.0
    %276 = vmatpush2.msra.mxu0 0.0
    %277 = vmatprep.subr.mxu0 0.0
    %278 = vmatpush2.msra.mxu0 0.0
    %279 = vmatprep.subr.mxu0 0.0
    %280 = vmatpush2.msra.mxu0 0.0
    %281 = vmatprep.subr.mxu0 0.0
    %282 = vmatpush2.msra.mxu0 0.0
    %283 = vmatprep.subr.mxu0 0.0
    %284 = vmatpush2.msra.mxu0 0.0
    %285 = vmatprep.subr.mxu0 0.0
    %286 = vmatpush2.msra.mxu0 0.0
    %287 = vmatprep.subr.mxu0 0.0
    %288 = vmatpush2.msra.mxu0 0.0
    %289 = vmatprep.subr.mxu0 0.0
    %290 = vmatpush2.msra.mxu0 0.0
    %291 = vmatprep.subr.mxu0 0.0
    %292 = vmatpush2.msra.mxu0 0.0
    %293 = vmatprep.subr.mxu0 0.0
    %294 = vmatpush2.msra.mxu0 0.0
    %295 = vmatprep.subr.mxu0 0.0
    %296 = vmatpush2.msra.mxu0 0.0
    %297 = vmatprep.subr.mxu0 0.0
    %298 = vmatpush2.msra.mxu0 0.0
    %299 = vmatprep.subr.mxu0 0.0
    %300 = vmatpush2.msra.mxu0 0.0
    %301 = vmatprep.subr.mxu0 0.0
    %302 = vmatpush2.msra.mxu0 0.0
    %303 = vmatprep.mubr.f32.mxu0 0.0
    %v304 = vand.u32 %v18, 4294901760
    %305 = vmatmul.mubr.f32.gmra.mxu0 %v304
    %v306 = vpop.f32.mrf.mxu0
    %v307 = vadd.f32 %v126, %v306
    %v308 = vpop.f32.mrf.mxu0
    %309 = vmatprep.mubr.f32.mxu0 0.0
    %v310 = vand.u32 %v19, 4294901760
    %311 = vmatmul.mubr.f32.gmra.mxu0 %v310
    %v312 = vpop.f32.mrf.mxu0
    %v313 = vadd.f32 %v136, %v312
    %v314 = vpop.f32.mrf.mxu0
    %315 = vmatprep.mubr.f32.mxu0 0.0
    %v316 = vand.u32 %v20, 4294901760
    %317 = vmatmul.mubr.f32.gmra.mxu0 %v316
    %v318 = vpop.f32.mrf.mxu0
    %v319 = vadd.f32 %v146, %v318
    %v320 = vpop.f32.mrf.mxu0
    %321 = vmatprep.mubr.f32.mxu0 0.0
    %v322 = vand.u32 %v21, 4294901760
    %323 = vmatmul.mubr.f32.gmra.mxu0 %v322
    %v324 = vpop.f32.mrf.mxu0
    %v325 = vadd.f32 %v156, %v324
    %v326 = vpop.f32.mrf.mxu0
    %327 = vdwg.mxu0
    %328 = vmatprep.subr.mxu0 0.0
    %v329 = vand.u32 %v37, 4294901760
    %v330 = vsub.f32 %v37, %v329
    %331 = vmatpush1.msra.mxu0 %v330
    %332 = vmatprep.subr.mxu0 0.0
    %v333 = vand.u32 %v36, 4294901760
    %v334 = vsub.f32 %v36, %v333
    %335 = vmatpush1.msra.mxu0 %v334
    %336 = vmatprep.subr.mxu0 0.0
    %v337 = vand.u32 %v35, 4294901760
    %v338 = vsub.f32 %v35, %v337
    %339 = vmatpush1.msra.mxu0 %v338
    %340 = vmatprep.subr.mxu0 0.0
    %v341 = vand.u32 %v34, 4294901760
    %v342 = vsub.f32 %v34, %v341
    %343 = vmatpush1.msra.mxu0 %v342
    %344 = vmatprep.subr.mxu0 0.0
    %v345 = vand.u32 %v33, 4294901760
    %v346 = vsub.f32 %v33, %v345
    %347 = vmatpush1.msra.mxu0 %v346
    %348 = vmatprep.subr.mxu0 0.0
    %v349 = vand.u32 %v32, 4294901760
    %v350 = vsub.f32 %v32, %v349
    %351 = vmatpush1.msra.mxu0 %v350
    %352 = vmatprep.subr.mxu0 0.0
    %v353 = vand.u32 %v31, 4294901760
    %v354 = vsub.f32 %v31, %v353
    %355 = vmatpush1.msra.mxu0 %v354
    %356 = vmatprep.subr.mxu0 0.0
    %v357 = vand.u32 %v30, 4294901760
    %v358 = vsub.f32 %v30, %v357
    %359 = vmatpush1.msra.mxu0 %v358
    %360 = vmatprep.subr.mxu0 0.0
    %v361 = vand.u32 %v29, 4294901760
    %v362 = vsub.f32 %v29, %v361
    %363 = vmatpush1.msra.mxu0 %v362
    %364 = vmatprep.subr.mxu0 0.0
    %v365 = vand.u32 %v28, 4294901760
    %v366 = vsub.f32 %v28, %v365
    %367 = vmatpush1.msra.mxu0 %v366
    %368 = vmatprep.subr.mxu0 0.0
    %v369 = vand.u32 %v27, 4294901760
    %v370 = vsub.f32 %v27, %v369
    %371 = vmatpush1.msra.mxu0 %v370
    %372 = vmatprep.subr.mxu0 0.0
    %v373 = vand.u32 %v26, 4294901760
    %v374 = vsub.f32 %v26, %v373
    %375 = vmatpush1.msra.mxu0 %v374
    %376 = vmatprep.subr.mxu0 0.0
    %v377 = vand.u32 %v25, 4294901760
    %v378 = vsub.f32 %v25, %v377
    %379 = vmatpush1.msra.mxu0 %v378
    %380 = vmatprep.subr.mxu0 0.0
    %v381 = vand.u32 %v24, 4294901760
    %v382 = vsub.f32 %v24, %v381
    %383 = vmatpush1.msra.mxu0 %v382
    %384 = vmatprep.subr.mxu0 0.0
    %v385 = vand.u32 %v23, 4294901760
    %v386 = vsub.f32 %v23, %v385
    %387 = vmatpush1.msra.mxu0 %v386
    %388 = vmatprep.subr.mxu0 0.0
    %v389 = vand.u32 %v22, 4294901760
    %v390 = vsub.f32 %v22, %v389
    %391 = vmatpush1.msra.mxu0 %v390
    %392 = vmatprep.subr.mxu0 0.0
    %393 = vmatpush2.msra.mxu0 0.0
    %394 = vmatprep.subr.mxu0 0.0
    %395 = vmatpush2.msra.mxu0 0.0
    %396 = vmatprep.subr.mxu0 0.0
    %397 = vmatpush2.msra.mxu0 0.0
    %398 = vmatprep.subr.mxu0 0.0
    %399 = vmatpush2.msra.mxu0 0.0
    %400 = vmatprep.subr.mxu0 0.0
    %401 = vmatpush2.msra.mxu0 0.0
    %402 = vmatprep.subr.mxu0 0.0
    %403 = vmatpush2.msra.mxu0 0.0
    %404 = vmatprep.subr.mxu0 0.0
    %405 = vmatpush2.msra.mxu0 0.0
    %406 = vmatprep.subr.mxu0 0.0
    %407 = vmatpush2.msra.mxu0 0.0
    %408 = vmatprep.subr.mxu0 0.0
    %409 = vmatpush2.msra.mxu0 0.0
    %410 = vmatprep.subr.mxu0 0.0
    %411 = vmatpush2.msra.mxu0 0.0
    %412 = vmatprep.subr.mxu0 0.0
    %413 = vmatpush2.msra.mxu0 0.0
    %414 = vmatprep.subr.mxu0 0.0
    %415 = vmatpush2.msra.mxu0 0.0
    %416 = vmatprep.subr.mxu0 0.0
    %417 = vmatpush2.msra.mxu0 0.0
    %418 = vmatprep.subr.mxu0 0.0
    %419 = vmatpush2.msra.mxu0 0.0
    %420 = vmatprep.subr.mxu0 0.0
    %421 = vmatpush2.msra.mxu0 0.0
    %422 = vmatprep.subr.mxu0 0.0
    %423 = vmatpush2.msra.mxu0 0.0
    %424 = vmatprep.mubr.f32.mxu0 0.0
    %v425 = vand.u32 %v18, 4294901760
    %v426 = vsub.f32 %v18, %v425
    %427 = vmatmul.mubr.f32.gmra.mxu0 %v426
    %v428 = vpop.f32.mrf.mxu0
    %v429 = vadd.f32 %v307, %v428
    %v430 = vpop.f32.mrf.mxu0
    %431 = vmatprep.mubr.f32.mxu0 0.0
    %v432 = vand.u32 %v19, 4294901760
    %v433 = vsub.f32 %v19, %v432
    %434 = vmatmul.mubr.f32.gmra.mxu0 %v433
    %v435 = vpop.f32.mrf.mxu0
    %v436 = vadd.f32 %v313, %v435
    %v437 = vpop.f32.mrf.mxu0
    %438 = vmatprep.mubr.f32.mxu0 0.0
    %v439 = vand.u32 %v20, 4294901760
    %v440 = vsub.f32 %v20, %v439
    %441 = vmatmul.mubr.f32.gmra.mxu0 %v440
    %v442 = vpop.f32.mrf.mxu0
    %v443 = vadd.f32 %v319, %v442
    %v444 = vpop.f32.mrf.mxu0
    %445 = vmatprep.mubr.f32.mxu0 0.0
    %v446 = vand.u32 %v21, 4294901760
    %v447 = vsub.f32 %v21, %v446
    %448 = vmatmul.mubr.f32.gmra.mxu0 %v447
    %v449 = vpop.f32.mrf.mxu0
    %v450 = vadd.f32 %v325, %v449
    %v451 = vpop.f32.mrf.mxu0
    %452 = vdwg.mxu0
    %453 = vmatprep.subr.mxu0 0.0
    %v454 = vand.u32 %v37, 4294901760
    %455 = vmatpush1.msra.mxu0 %v454
    %456 = vmatprep.subr.mxu0 0.0
    %v457 = vand.u32 %v36, 4294901760
    %458 = vmatpush1.msra.mxu0 %v457
    %459 = vmatprep.subr.mxu0 0.0
    %v460 = vand.u32 %v35, 4294901760
    %461 = vmatpush1.msra.mxu0 %v460
    %462 = vmatprep.subr.mxu0 0.0
    %v463 = vand.u32 %v34, 4294901760
    %464 = vmatpush1.msra.mxu0 %v463
    %465 = vmatprep.subr.mxu0 0.0
    %v466 = vand.u32 %v33, 4294901760
    %467 = vmatpush1.msra.mxu0 %v466
    %468 = vmatprep.subr.mxu0 0.0
    %v469 = vand.u32 %v32, 4294901760
    %470 = vmatpush1.msra.mxu0 %v469
    %471 = vmatprep.subr.mxu0 0.0
    %v472 = vand.u32 %v31, 4294901760
    %473 = vmatpush1.msra.mxu0 %v472
    %474 = vmatprep.subr.mxu0 0.0
    %v475 = vand.u32 %v30, 4294901760
    %476 = vmatpush1.msra.mxu0 %v475
    %477 = vmatprep.subr.mxu0 0.0
    %v478 = vand.u32 %v29, 4294901760
    %479 = vmatpush1.msra.mxu0 %v478
    %480 = vmatprep.subr.mxu0 0.0
    %v481 = vand.u32 %v28, 4294901760
    %482 = vmatpush1.msra.mxu0 %v481
    %483 = vmatprep.subr.mxu0 0.0
    %v484 = vand.u32 %v27, 4294901760
    %485 = vmatpush1.msra.mxu0 %v484
    %486 = vmatprep.subr.mxu0 0.0
    %v487 = vand.u32 %v26, 4294901760
    %488 = vmatpush1.msra.mxu0 %v487
    %489 = vmatprep.subr.mxu0 0.0
    %v490 = vand.u32 %v25, 4294901760
    %491 = vmatpush1.msra.mxu0 %v490
    %492 = vmatprep.subr.mxu0 0.0
    %v493 = vand.u32 %v24, 4294901760
    %494 = vmatpush1.msra.mxu0 %v493
    %495 = vmatprep.subr.mxu0 0.0
    %v496 = vand.u32 %v23, 4294901760
    %497 = vmatpush1.msra.mxu0 %v496
    %498 = vmatprep.subr.mxu0 0.0
    %v499 = vand.u32 %v22, 4294901760
    %500 = vmatpush1.msra.mxu0 %v499
    %501 = vmatprep.subr.mxu0 0.0
    %502 = vmatpush2.msra.mxu0 0.0
    %503 = vmatprep.subr.mxu0 0.0
    %504 = vmatpush2.msra.mxu0 0.0
    %505 = vmatprep.subr.mxu0 0.0
    %506 = vmatpush2.msra.mxu0 0.0
    %507 = vmatprep.subr.mxu0 0.0
    %508 = vmatpush2.msra.mxu0 0.0
    %509 = vmatprep.subr.mxu0 0.0
    %510 = vmatpush2.msra.mxu0 0.0
    %511 = vmatprep.subr.mxu0 0.0
    %512 = vmatpush2.msra.mxu0 0.0
    %513 = vmatprep.subr.mxu0 0.0
    %514 = vmatpush2.msra.mxu0 0.0
    %515 = vmatprep.subr.mxu0 0.0
    %516 = vmatpush2.msra.mxu0 0.0
    %517 = vmatprep.subr.mxu0 0.0
    %518 = vmatpush2.msra.mxu0 0.0
    %519 = vmatprep.subr.mxu0 0.0
    %520 = vmatpush2.msra.mxu0 0.0
    %521 = vmatprep.subr.mxu0 0.0
    %522 = vmatpush2.msra.mxu0 0.0
    %523 = vmatprep.subr.mxu0 0.0
    %524 = vmatpush2.msra.mxu0 0.0
    %525 = vmatprep.subr.mxu0 0.0
    %526 = vmatpush2.msra.mxu0 0.0
    %527 = vmatprep.subr.mxu0 0.0
    %528 = vmatpush2.msra.mxu0 0.0
    %529 = vmatprep.subr.mxu0 0.0
    %530 = vmatpush2.msra.mxu0 0.0
    %531 = vmatprep.subr.mxu0 0.0
    %532 = vmatpush2.msra.mxu0 0.0
    %533 = vmatprep.mubr.f32.mxu0 0.0
    %v534 = vand.u32 %v18, 4294901760
    %v535 = vsub.f32 %v18, %v534
    %v536 = vand.u32 %v535, 4294901760
    %537 = vmatmul.mubr.f32.gmra.mxu0 %v536
    %v538 = vpop.f32.mrf.mxu0
    %v539 = vadd.f32 %v429, %v538
    %v540 = vpop.f32.mrf.mxu0
    %541 = vmatprep.mubr.f32.mxu0 0.0
    %v542 = vand.u32 %v19, 4294901760
    %v543 = vsub.f32 %v19, %v542
    %v544 = vand.u32 %v543, 4294901760
    %545 = vmatmul.mubr.f32.gmra.mxu0 %v544
    %v546 = vpop.f32.mrf.mxu0
    %v547 = vadd.f32 %v436, %v546
    %v548 = vpop.f32.mrf.mxu0
    %549 = vmatprep.mubr.f32.mxu0 0.0
    %v550 = vand.u32 %v20, 4294901760
    %v551 = vsub.f32 %v20, %v550
    %v552 = vand.u32 %v551, 4294901760
    %553 = vmatmul.mubr.f32.gmra.mxu0 %v552
    %v554 = vpop.f32.mrf.mxu0
    %v555 = vadd.f32 %v443, %v554
    %v556 = vpop.f32.mrf.mxu0
    %557 = vmatprep.mubr.f32.mxu0 0.0
    %v558 = vand.u32 %v21, 4294901760
    %v559 = vsub.f32 %v21, %v558
    %v560 = vand.u32 %v559, 4294901760
    %561 = vmatmul.mubr.f32.gmra.mxu0 %v560
    %v562 = vpop.f32.mrf.mxu0
    %v563 = vadd.f32 %v450, %v562
    %v564 = vpop.f32.mrf.mxu0
    %565 = vdwg.mxu0
    %566 = vmatprep.subr.mxu0 0.0
    %v567 = vand.u32 %v37, 4294901760
    %v568 = vsub.f32 %v37, %v567
    %v569 = vand.u32 %v568, 4294901760
    %570 = vmatpush1.msra.mxu0 %v569
    %571 = vmatprep.subr.mxu0 0.0
    %v572 = vand.u32 %v36, 4294901760
    %v573 = vsub.f32 %v36, %v572
    %v574 = vand.u32 %v573, 4294901760
    %575 = vmatpush1.msra.mxu0 %v574
    %576 = vmatprep.subr.mxu0 0.0
    %v577 = vand.u32 %v35, 4294901760
    %v578 = vsub.f32 %v35, %v577
    %v579 = vand.u32 %v578, 4294901760
    %580 = vmatpush1.msra.mxu0 %v579
    %581 = vmatprep.subr.mxu0 0.0
    %v582 = vand.u32 %v34, 4294901760
    %v583 = vsub.f32 %v34, %v582
    %v584 = vand.u32 %v583, 4294901760
    %585 = vmatpush1.msra.mxu0 %v584
    %586 = vmatprep.subr.mxu0 0.0
    %v587 = vand.u32 %v33, 4294901760
    %v588 = vsub.f32 %v33, %v587
    %v589 = vand.u32 %v588, 4294901760
    %590 = vmatpush1.msra.mxu0 %v589
    %591 = vmatprep.subr.mxu0 0.0
    %v592 = vand.u32 %v32, 4294901760
    %v593 = vsub.f32 %v32, %v592
    %v594 = vand.u32 %v593, 4294901760
    %595 = vmatpush1.msra.mxu0 %v594
    %596 = vmatprep.subr.mxu0 0.0
    %v597 = vand.u32 %v31, 4294901760
    %v598 = vsub.f32 %v31, %v597
    %v599 = vand.u32 %v598, 4294901760
    %600 = vmatpush1.msra.mxu0 %v599
    %601 = vmatprep.subr.mxu0 0.0
    %v602 = vand.u32 %v30, 4294901760
    %v603 = vsub.f32 %v30, %v602
    %v604 = vand.u32 %v603, 4294901760
    %605 = vmatpush1.msra.mxu0 %v604
    %606 = vmatprep.subr.mxu0 0.0
    %v607 = vand.u32 %v29, 4294901760
    %v608 = vsub.f32 %v29, %v607
    %v609 = vand.u32 %v608, 4294901760
    %610 = vmatpush1.msra.mxu0 %v609
    %611 = vmatprep.subr.mxu0 0.0
    %v612 = vand.u32 %v28, 4294901760
    %v613 = vsub.f32 %v28, %v612
    %v614 = vand.u32 %v613, 4294901760
    %615 = vmatpush1.msra.mxu0 %v614
    %616 = vmatprep.subr.mxu0 0.0
    %v617 = vand.u32 %v27, 4294901760
    %v618 = vsub.f32 %v27, %v617
    %v619 = vand.u32 %v618, 4294901760
    %620 = vmatpush1.msra.mxu0 %v619
    %621 = vmatprep.subr.mxu0 0.0
    %v622 = vand.u32 %v26, 4294901760
    %v623 = vsub.f32 %v26, %v622
    %v624 = vand.u32 %v623, 4294901760
    %625 = vmatpush1.msra.mxu0 %v624
    %626 = vmatprep.subr.mxu0 0.0
    %v627 = vand.u32 %v25, 4294901760
    %v628 = vsub.f32 %v25, %v627
    %v629 = vand.u32 %v628, 4294901760
    %630 = vmatpush1.msra.mxu0 %v629
    %631 = vmatprep.subr.mxu0 0.0
    %v632 = vand.u32 %v24, 4294901760
    %v633 = vsub.f32 %v24, %v632
    %v634 = vand.u32 %v633, 4294901760
    %635 = vmatpush1.msra.mxu0 %v634
    %636 = vmatprep.subr.mxu0 0.0
    %v637 = vand.u32 %v23, 4294901760
    %v638 = vsub.f32 %v23, %v637
    %v639 = vand.u32 %v638, 4294901760
    %640 = vmatpush1.msra.mxu0 %v639
    %641 = vmatprep.subr.mxu0 0.0
    %v642 = vand.u32 %v22, 4294901760
    %v643 = vsub.f32 %v22, %v642
    %v644 = vand.u32 %v643, 4294901760
    %645 = vmatpush1.msra.mxu0 %v644
    %646 = vmatprep.subr.mxu0 0.0
    %647 = vmatpush2.msra.mxu0 0.0
    %648 = vmatprep.subr.mxu0 0.0
    %649 = vmatpush2.msra.mxu0 0.0
    %650 = vmatprep.subr.mxu0 0.0
    %651 = vmatpush2.msra.mxu0 0.0
    %652 = vmatprep.subr.mxu0 0.0
    %653 = vmatpush2.msra.mxu0 0.0
    %654 = vmatprep.subr.mxu0 0.0
    %655 = vmatpush2.msra.mxu0 0.0
    %656 = vmatprep.subr.mxu0 0.0
    %657 = vmatpush2.msra.mxu0 0.0
    %658 = vmatprep.subr.mxu0 0.0
    %659 = vmatpush2.msra.mxu0 0.0
    %660 = vmatprep.subr.mxu0 0.0
    %661 = vmatpush2.msra.mxu0 0.0
    %662 = vmatprep.subr.mxu0 0.0
    %663 = vmatpush2.msra.mxu0 0.0
    %664 = vmatprep.subr.mxu0 0.0
    %665 = vmatpush2.msra.mxu0 0.0
    %666 = vmatprep.subr.mxu0 0.0
    %667 = vmatpush2.msra.mxu0 0.0
    %668 = vmatprep.subr.mxu0 0.0
    %669 = vmatpush2.msra.mxu0 0.0
    %670 = vmatprep.subr.mxu0 0.0
    %671 = vmatpush2.msra.mxu0 0.0
    %672 = vmatprep.subr.mxu0 0.0
    %673 = vmatpush2.msra.mxu0 0.0
    %674 = vmatprep.subr.mxu0 0.0
    %675 = vmatpush2.msra.mxu0 0.0
    %676 = vmatprep.subr.mxu0 0.0
    %677 = vmatpush2.msra.mxu0 0.0
    %678 = vmatprep.mubr.f32.mxu0 0.0
    %v679 = vand.u32 %v18, 4294901760
    %680 = vmatmul.mubr.f32.gmra.mxu0 %v679
    %v681 = vpop.f32.mrf.mxu0
    %v682 = vadd.f32 %v539, %v681
    %v683 = vpop.f32.mrf.mxu0
    %684 = vmatprep.mubr.f32.mxu0 0.0
    %v685 = vand.u32 %v19, 4294901760
    %686 = vmatmul.mubr.f32.gmra.mxu0 %v685
    %v687 = vpop.f32.mrf.mxu0
    %v688 = vadd.f32 %v547, %v687
    %v689 = vpop.f32.mrf.mxu0
    %690 = vmatprep.mubr.f32.mxu0 0.0
    %v691 = vand.u32 %v20, 4294901760
    %692 = vmatmul.mubr.f32.gmra.mxu0 %v691
    %v693 = vpop.f32.mrf.mxu0
    %v694 = vadd.f32 %v555, %v693
    %v695 = vpop.f32.mrf.mxu0
    %696 = vmatprep.mubr.f32.mxu0 0.0
    %v697 = vand.u32 %v21, 4294901760
    %698 = vmatmul.mubr.f32.gmra.mxu0 %v697
    %v699 = vpop.f32.mrf.mxu0
    %v700 = vadd.f32 %v563, %v699
    %v701 = vpop.f32.mrf.mxu0
    %702 = vdwg.mxu0
    %703 = vmatprep.subr.mxu0 0.0
    %v704 = vand.u32 %v37, 4294901760
    %705 = vmatpush1.msra.mxu0 %v704
    %706 = vmatprep.subr.mxu0 0.0
    %v707 = vand.u32 %v36, 4294901760
    %708 = vmatpush1.msra.mxu0 %v707
    %709 = vmatprep.subr.mxu0 0.0
    %v710 = vand.u32 %v35, 4294901760
    %711 = vmatpush1.msra.mxu0 %v710
    %712 = vmatprep.subr.mxu0 0.0
    %v713 = vand.u32 %v34, 4294901760
    %714 = vmatpush1.msra.mxu0 %v713
    %715 = vmatprep.subr.mxu0 0.0
    %v716 = vand.u32 %v33, 4294901760
    %717 = vmatpush1.msra.mxu0 %v716
    %718 = vmatprep.subr.mxu0 0.0
    %v719 = vand.u32 %v32, 4294901760
    %720 = vmatpush1.msra.mxu0 %v719
    %721 = vmatprep.subr.mxu0 0.0
    %v722 = vand.u32 %v31, 4294901760
    %723 = vmatpush1.msra.mxu0 %v722
    %724 = vmatprep.subr.mxu0 0.0
    %v725 = vand.u32 %v30, 4294901760
    %726 = vmatpush1.msra.mxu0 %v725
    %727 = vmatprep.subr.mxu0 0.0
    %v728 = vand.u32 %v29, 4294901760
    %729 = vmatpush1.msra.mxu0 %v728
    %730 = vmatprep.subr.mxu0 0.0
    %v731 = vand.u32 %v28, 4294901760
    %732 = vmatpush1.msra.mxu0 %v731
    %733 = vmatprep.subr.mxu0 0.0
    %v734 = vand.u32 %v27, 4294901760
    %735 = vmatpush1.msra.mxu0 %v734
    %736 = vmatprep.subr.mxu0 0.0
    %v737 = vand.u32 %v26, 4294901760
    %738 = vmatpush1.msra.mxu0 %v737
    %739 = vmatprep.subr.mxu0 0.0
    %v740 = vand.u32 %v25, 4294901760
    %741 = vmatpush1.msra.mxu0 %v740
    %742 = vmatprep.subr.mxu0 0.0
    %v743 = vand.u32 %v24, 4294901760
    %744 = vmatpush1.msra.mxu0 %v743
    %745 = vmatprep.subr.mxu0 0.0
    %v746 = vand.u32 %v23, 4294901760
    %747 = vmatpush1.msra.mxu0 %v746
    %748 = vmatprep.subr.mxu0 0.0
    %v749 = vand.u32 %v22, 4294901760
    %750 = vmatpush1.msra.mxu0 %v749
    %751 = vmatprep.subr.mxu0 0.0
    %752 = vmatpush2.msra.mxu0 0.0
    %753 = vmatprep.subr.mxu0 0.0
    %754 = vmatpush2.msra.mxu0 0.0
    %755 = vmatprep.subr.mxu0 0.0
    %756 = vmatpush2.msra.mxu0 0.0
    %757 = vmatprep.subr.mxu0 0.0
    %758 = vmatpush2.msra.mxu0 0.0
    %759 = vmatprep.subr.mxu0 0.0
    %760 = vmatpush2.msra.mxu0 0.0
    %761 = vmatprep.subr.mxu0 0.0
    %762 = vmatpush2.msra.mxu0 0.0
    %763 = vmatprep.subr.mxu0 0.0
    %764 = vmatpush2.msra.mxu0 0.0
    %765 = vmatprep.subr.mxu0 0.0
    %766 = vmatpush2.msra.mxu0 0.0
    %767 = vmatprep.subr.mxu0 0.0
    %768 = vmatpush2.msra.mxu0 0.0
    %769 = vmatprep.subr.mxu0 0.0
    %770 = vmatpush2.msra.mxu0 0.0
    %771 = vmatprep.subr.mxu0 0.0
    %772 = vmatpush2.msra.mxu0 0.0
    %773 = vmatprep.subr.mxu0 0.0
    %774 = vmatpush2.msra.mxu0 0.0
    %775 = vmatprep.subr.mxu0 0.0
    %776 = vmatpush2.msra.mxu0 0.0
    %777 = vmatprep.subr.mxu0 0.0
    %778 = vmatpush2.msra.mxu0 0.0
    %779 = vmatprep.subr.mxu0 0.0
    %780 = vmatpush2.msra.mxu0 0.0
    %781 = vmatprep.subr.mxu0 0.0
    %782 = vmatpush2.msra.mxu0 0.0
    %783 = vmatprep.mubr.f32.mxu0 0.0
    %v784 = vand.u32 %v18, 4294901760
    %785 = vmatmul.mubr.f32.gmra.mxu0 %v784
    %v786 = vpop.f32.mrf.mxu0
    %v787 = vadd.f32 %v682, %v786
    %v788 = vpop.f32.mrf.mxu0
    %789 = vmatprep.mubr.f32.mxu0 0.0
    %v790 = vand.u32 %v19, 4294901760
    %791 = vmatmul.mubr.f32.gmra.mxu0 %v790
    %v792 = vpop.f32.mrf.mxu0
    %v793 = vadd.f32 %v688, %v792
    %v794 = vpop.f32.mrf.mxu0
    %795 = vmatprep.mubr.f32.mxu0 0.0
    %v796 = vand.u32 %v20, 4294901760
    %797 = vmatmul.mubr.f32.gmra.mxu0 %v796
    %v798 = vpop.f32.mrf.mxu0
    %v799 = vadd.f32 %v694, %v798
    %v800 = vpop.f32.mrf.mxu0
    %801 = vmatprep.mubr.f32.mxu0 0.0
    %v802 = vand.u32 %v21, 4294901760
    %803 = vmatmul.mubr.f32.gmra.mxu0 %v802
    %v804 = vpop.f32.mrf.mxu0
    %v805 = vadd.f32 %v700, %v804
    %v806 = vpop.f32.mrf.mxu0
    %807 = vdwg.mxu0
    %v808 = vmul.f32 %v787, 0.03125
    %v809 = vmul.f32 %v793, 0.03125
    %v810 = vmul.f32 %v799, 0.03125
    %v811 = vmul.f32 %v805, 0.03125
    %v812 = vld [vmem:[%s2] sm:$0xf]
    %vm813 = vcmask 31744
    %v815 = vsel %vm813, %v808, 0
    %v818 = vsel %vm813, %v809, 0
    %v821 = vsel %vm813, %v810, 0
    %v824 = vsel %vm813, %v811, 0
    %vm826 = vcmask 1043456
    %v828 = vsel %vm826, %v812, 0
    %830 = vmatprep.subr.mxu0 0.0
    %831 = vmatpush1.msra.mxu0 0.0
    %832 = vmatprep.subr.mxu0 0.0
    %833 = vmatpush1.msra.mxu0 0.0
    %834 = vmatprep.subr.mxu0 0.0
    %835 = vmatpush1.msra.mxu0 0.0
    %836 = vmatprep.subr.mxu0 0.0
    %837 = vmatpush1.msra.mxu0 0.0
    %838 = vmatprep.subr.mxu0 0.0
    %839 = vmatpush1.msra.mxu0 0.0
    %840 = vmatprep.subr.mxu0 0.0
    %841 = vmatpush1.msra.mxu0 0.0
    %842 = vmatprep.subr.mxu0 0.0
    %843 = vmatpush1.msra.mxu0 0.0
    %844 = vmatprep.subr.mxu0 0.0
    %845 = vmatpush1.msra.mxu0 0.0
    %846 = vmatprep.subr.mxu0 0.0
    %847 = vmatpush1.msra.mxu0 0.0
    %848 = vmatprep.subr.mxu0 0.0
    %849 = vmatpush1.msra.mxu0 0.0
    %850 = vmatprep.subr.mxu0 0.0
    %851 = vmatpush1.msra.mxu0 0.0
    %852 = vmatprep.subr.mxu0 0.0
    %853 = vmatpush1.msra.mxu0 0.0
    %854 = vmatprep.subr.mxu0 0.0
    %855 = vmatpush1.msra.mxu0 0.0
    %856 = vmatprep.subr.mxu0 0.0
    %857 = vmatpush1.msra.mxu0 0.0
    %858 = vmatprep.subr.mxu0 0.0
    %859 = vmatpush1.msra.mxu0 0.0
    %860 = vmatprep.subr.mxu0 0.0
    %v861 = vand.u32 %v828, 4294901760
    %862 = vmatpush1.msra.mxu0 %v861
    %863 = vmatprep.subr.mxu0 0.0
    %864 = vmatpush2.msra.mxu0 0.0
    %865 = vmatprep.subr.mxu0 0.0
    %866 = vmatpush2.msra.mxu0 0.0
    %867 = vmatprep.subr.mxu0 0.0
    %868 = vmatpush2.msra.mxu0 0.0
    %869 = vmatprep.subr.mxu0 0.0
    %870 = vmatpush2.msra.mxu0 0.0
    %871 = vmatprep.subr.mxu0 0.0
    %872 = vmatpush2.msra.mxu0 0.0
    %873 = vmatprep.subr.mxu0 0.0
    %874 = vmatpush2.msra.mxu0 0.0
    %875 = vmatprep.subr.mxu0 0.0
    %876 = vmatpush2.msra.mxu0 0.0
    %877 = vmatprep.subr.mxu0 0.0
    %878 = vmatpush2.msra.mxu0 0.0
    %879 = vmatprep.subr.mxu0 0.0
    %880 = vmatpush2.msra.mxu0 0.0
    %881 = vmatprep.subr.mxu0 0.0
    %882 = vmatpush2.msra.mxu0 0.0
    %883 = vmatprep.subr.mxu0 0.0
    %884 = vmatpush2.msra.mxu0 0.0
    %885 = vmatprep.subr.mxu0 0.0
    %886 = vmatpush2.msra.mxu0 0.0
    %887 = vmatprep.subr.mxu0 0.0
    %888 = vmatpush2.msra.mxu0 0.0
    %889 = vmatprep.subr.mxu0 0.0
    %890 = vmatpush2.msra.mxu0 0.0
    %891 = vmatprep.subr.mxu0 0.0
    %892 = vmatpush2.msra.mxu0 0.0
    %893 = vmatprep.subr.mxu0 0.0
    %894 = vmatpush2.msra.mxu0 0.0
    %895 = vmatprep.mubr.f32.mxu0 0.0
    %v896 = vand.u32 %v815, 4294901760
    %v897 = vsub.f32 %v815, %v896
    %v898 = vand.u32 %v897, 4294901760
    %v899 = vsub.f32 %v897, %v898
    %v900 = vand.u32 %v899, 4294901760
    %901 = vmatmul.mubr.f32.gmra.mxu0 %v900
    %v902 = vpop.f32.mrf.mxu0
    %v903 = vadd.f32 0.0, %v902
    %v904 = vpop.f32.mrf.mxu0
    %905 = vmatprep.mubr.f32.mxu0 0.0
    %v906 = vand.u32 %v818, 4294901760
    %v907 = vsub.f32 %v818, %v906
    %v908 = vand.u32 %v907, 4294901760
    %v909 = vsub.f32 %v907, %v908
    %v910 = vand.u32 %v909, 4294901760
    %911 = vmatmul.mubr.f32.gmra.mxu0 %v910
    %v912 = vpop.f32.mrf.mxu0
    %v913 = vadd.f32 0.0, %v912
    %v914 = vpop.f32.mrf.mxu0
    %915 = vmatprep.mubr.f32.mxu0 0.0
    %v916 = vand.u32 %v821, 4294901760
    %v917 = vsub.f32 %v821, %v916
    %v918 = vand.u32 %v917, 4294901760
    %v919 = vsub.f32 %v917, %v918
    %v920 = vand.u32 %v919, 4294901760
    %921 = vmatmul.mubr.f32.gmra.mxu0 %v920
    %v922 = vpop.f32.mrf.mxu0
    %v923 = vadd.f32 0.0, %v922
    %v924 = vpop.f32.mrf.mxu0
    %925 = vmatprep.mubr.f32.mxu0 0.0
    %v926 = vand.u32 %v824, 4294901760
    %v927 = vsub.f32 %v824, %v926
    %v928 = vand.u32 %v927, 4294901760
    %v929 = vsub.f32 %v927, %v928
    %v930 = vand.u32 %v929, 4294901760
    %931 = vmatmul.mubr.f32.gmra.mxu0 %v930
    %v932 = vpop.f32.mrf.mxu0
    %v933 = vadd.f32 0.0, %v932
    %v934 = vpop.f32.mrf.mxu0
    %935 = vdwg.mxu0
    %936 = vmatprep.subr.mxu0 0.0
    %937 = vmatpush1.msra.mxu0 0.0
    %938 = vmatprep.subr.mxu0 0.0
    %939 = vmatpush1.msra.mxu0 0.0
    %940 = vmatprep.subr.mxu0 0.0
    %941 = vmatpush1.msra.mxu0 0.0
    %942 = vmatprep.subr.mxu0 0.0
    %943 = vmatpush1.msra.mxu0 0.0
    %944 = vmatprep.subr.mxu0 0.0
    %945 = vmatpush1.msra.mxu0 0.0
    %946 = vmatprep.subr.mxu0 0.0
    %947 = vmatpush1.msra.mxu0 0.0
    %948 = vmatprep.subr.mxu0 0.0
    %949 = vmatpush1.msra.mxu0 0.0
    %950 = vmatprep.subr.mxu0 0.0
    %951 = vmatpush1.msra.mxu0 0.0
    %952 = vmatprep.subr.mxu0 0.0
    %953 = vmatpush1.msra.mxu0 0.0
    %954 = vmatprep.subr.mxu0 0.0
    %955 = vmatpush1.msra.mxu0 0.0
    %956 = vmatprep.subr.mxu0 0.0
    %957 = vmatpush1.msra.mxu0 0.0
    %958 = vmatprep.subr.mxu0 0.0
    %959 = vmatpush1.msra.mxu0 0.0
    %960 = vmatprep.subr.mxu0 0.0
    %961 = vmatpush1.msra.mxu0 0.0
    %962 = vmatprep.subr.mxu0 0.0
    %963 = vmatpush1.msra.mxu0 0.0
    %964 = vmatprep.subr.mxu0 0.0
    %965 = vmatpush1.msra.mxu0 0.0
    %966 = vmatprep.subr.mxu0 0.0
    %v967 = vand.u32 %v828, 4294901760
    %v968 = vsub.f32 %v828, %v967
    %v969 = vand.u32 %v968, 4294901760
    %v970 = vsub.f32 %v968, %v969
    %v971 = vand.u32 %v970, 4294901760
    %972 = vmatpush1.msra.mxu0 %v971
    %973 = vmatprep.subr.mxu0 0.0
    %974 = vmatpush2.msra.mxu0 0.0
    %975 = vmatprep.subr.mxu0 0.0
    %976 = vmatpush2.msra.mxu0 0.0
    %977 = vmatprep.subr.mxu0 0.0
    %978 = vmatpush2.msra.mxu0 0.0
    %979 = vmatprep.subr.mxu0 0.0
    %980 = vmatpush2.msra.mxu0 0.0
    %981 = vmatprep.subr.mxu0 0.0
    %982 = vmatpush2.msra.mxu0 0.0
    %983 = vmatprep.subr.mxu0 0.0
    %984 = vmatpush2.msra.mxu0 0.0
    %985 = vmatprep.subr.mxu0 0.0
    %986 = vmatpush2.msra.mxu0 0.0
    %987 = vmatprep.subr.mxu0 0.0
    %988 = vmatpush2.msra.mxu0 0.0
    %989 = vmatprep.subr.mxu0 0.0
    %990 = vmatpush2.msra.mxu0 0.0
    %991 = vmatprep.subr.mxu0 0.0
    %992 = vmatpush2.msra.mxu0 0.0
    %993 = vmatprep.subr.mxu0 0.0
    %994 = vmatpush2.msra.mxu0 0.0
    %995 = vmatprep.subr.mxu0 0.0
    %996 = vmatpush2.msra.mxu0 0.0
    %997 = vmatprep.subr.mxu0 0.0
    %998 = vmatpush2.msra.mxu0 0.0
    %999 = vmatprep.subr.mxu0 0.0
    %1000 = vmatpush2.msra.mxu0 0.0
    %1001 = vmatprep.subr.mxu0 0.0
    %1002 = vmatpush2.msra.mxu0 0.0
    %1003 = vmatprep.subr.mxu0 0.0
    %1004 = vmatpush2.msra.mxu0 0.0
    %1005 = vmatprep.mubr.f32.mxu0 0.0
    %v1006 = vand.u32 %v815, 4294901760
    %1007 = vmatmul.mubr.f32.gmra.mxu0 %v1006
    %v1008 = vpop.f32.mrf.mxu0
    %v1009 = vadd.f32 %v903, %v1008
    %v1010 = vpop.f32.mrf.mxu0
    %1011 = vmatprep.mubr.f32.mxu0 0.0
    %v1012 = vand.u32 %v818, 4294901760
    %1013 = vmatmul.mubr.f32.gmra.mxu0 %v1012
    %v1014 = vpop.f32.mrf.mxu0
    %v1015 = vadd.f32 %v913, %v1014
    %v1016 = vpop.f32.mrf.mxu0
    %1017 = vmatprep.mubr.f32.mxu0 0.0
    %v1018 = vand.u32 %v821, 4294901760
    %1019 = vmatmul.mubr.f32.gmra.mxu0 %v1018
    %v1020 = vpop.f32.mrf.mxu0
    %v1021 = vadd.f32 %v923, %v1020
    %v1022 = vpop.f32.mrf.mxu0
    %1023 = vmatprep.mubr.f32.mxu0 0.0
    %v1024 = vand.u32 %v824, 4294901760
    %1025 = vmatmul.mubr.f32.gmra.mxu0 %v1024
    %v1026 = vpop.f32.mrf.mxu0
    %v1027 = vadd.f32 %v933, %v1026
    %v1028 = vpop.f32.mrf.mxu0
    %1029 = vdwg.mxu0
    %1030 = vmatprep.subr.mxu0 0.0
    %1031 = vmatpush1.msra.mxu0 0.0
    %1032 = vmatprep.subr.mxu0 0.0
    %1033 = vmatpush1.msra.mxu0 0.0
    %1034 = vmatprep.subr.mxu0 0.0
    %1035 = vmatpush1.msra.mxu0 0.0
    %1036 = vmatprep.subr.mxu0 0.0
    %1037 = vmatpush1.msra.mxu0 0.0
    %1038 = vmatprep.subr.mxu0 0.0
    %1039 = vmatpush1.msra.mxu0 0.0
    %1040 = vmatprep.subr.mxu0 0.0
    %1041 = vmatpush1.msra.mxu0 0.0
    %1042 = vmatprep.subr.mxu0 0.0
    %1043 = vmatpush1.msra.mxu0 0.0
    %1044 = vmatprep.subr.mxu0 0.0
    %1045 = vmatpush1.msra.mxu0 0.0
    %1046 = vmatprep.subr.mxu0 0.0
    %1047 = vmatpush1.msra.mxu0 0.0
    %1048 = vmatprep.subr.mxu0 0.0
    %1049 = vmatpush1.msra.mxu0 0.0
    %1050 = vmatprep.subr.mxu0 0.0
    %1051 = vmatpush1.msra.mxu0 0.0
    %1052 = vmatprep.subr.mxu0 0.0
    %1053 = vmatpush1.msra.mxu0 0.0
    %1054 = vmatprep.subr.mxu0 0.0
    %1055 = vmatpush1.msra.mxu0 0.0
    %1056 = vmatprep.subr.mxu0 0.0
    %1057 = vmatpush1.msra.mxu0 0.0
    %1058 = vmatprep.subr.mxu0 0.0
    %1059 = vmatpush1.msra.mxu0 0.0
    %1060 = vmatprep.subr.mxu0 0.0
    %v1061 = vand.u32 %v828, 4294901760
    %v1062 = vsub.f32 %v828, %v1061
    %1063 = vmatpush1.msra.mxu0 %v1062
    %1064 = vmatprep.subr.mxu0 0.0
    %1065 = vmatpush2.msra.mxu0 0.0
    %1066 = vmatprep.subr.mxu0 0.0
    %1067 = vmatpush2.msra.mxu0 0.0
    %1068 = vmatprep.subr.mxu0 0.0
    %1069 = vmatpush2.msra.mxu0 0.0
    %1070 = vmatprep.subr.mxu0 0.0
    %1071 = vmatpush2.msra.mxu0 0.0
    %1072 = vmatprep.subr.mxu0 0.0
    %1073 = vmatpush2.msra.mxu0 0.0
    %1074 = vmatprep.subr.mxu0 0.0
    %1075 = vmatpush2.msra.mxu0 0.0
    %1076 = vmatprep.subr.mxu0 0.0
    %1077 = vmatpush2.msra.mxu0 0.0
    %1078 = vmatprep.subr.mxu0 0.0
    %1079 = vmatpush2.msra.mxu0 0.0
    %1080 = vmatprep.subr.mxu0 0.0
    %1081 = vmatpush2.msra.mxu0 0.0
    %1082 = vmatprep.subr.mxu0 0.0
    %1083 = vmatpush2.msra.mxu0 0.0
    %1084 = vmatprep.subr.mxu0 0.0
    %1085 = vmatpush2.msra.mxu0 0.0
    %1086 = vmatprep.subr.mxu0 0.0
    %1087 = vmatpush2.msra.mxu0 0.0
    %1088 = vmatprep.subr.mxu0 0.0
    %1089 = vmatpush2.msra.mxu0 0.0
    %1090 = vmatprep.subr.mxu0 0.0
    %1091 = vmatpush2.msra.mxu0 0.0
    %1092 = vmatprep.subr.mxu0 0.0
    %1093 = vmatpush2.msra.mxu0 0.0
    %1094 = vmatprep.subr.mxu0 0.0
    %1095 = vmatpush2.msra.mxu0 0.0
    %1096 = vmatprep.mubr.f32.mxu0 0.0
    %v1097 = vand.u32 %v815, 4294901760
    %v1098 = vsub.f32 %v815, %v1097
    %1099 = vmatmul.mubr.f32.gmra.mxu0 %v1098
    %v1100 = vpop.f32.mrf.mxu0
    %v1101 = vadd.f32 %v1009, %v1100
    %v1102 = vpop.f32.mrf.mxu0
    %1103 = vmatprep.mubr.f32.mxu0 0.0
    %v1104 = vand.u32 %v818, 4294901760
    %v1105 = vsub.f32 %v818, %v1104
    %1106 = vmatmul.mubr.f32.gmra.mxu0 %v1105
    %v1107 = vpop.f32.mrf.mxu0
    %v1108 = vadd.f32 %v1015, %v1107
    %v1109 = vpop.f32.mrf.mxu0
    %1110 = vmatprep.mubr.f32.mxu0 0.0
    %v1111 = vand.u32 %v821, 4294901760
    %v1112 = vsub.f32 %v821, %v1111
    %1113 = vmatmul.mubr.f32.gmra.mxu0 %v1112
    %v1114 = vpop.f32.mrf.mxu0
    %v1115 = vadd.f32 %v1021, %v1114
    %v1116 = vpop.f32.mrf.mxu0
    %1117 = vmatprep.mubr.f32.mxu0 0.0
    %v1118 = vand.u32 %v824, 4294901760
    %v1119 = vsub.f32 %v824, %v1118
    %1120 = vmatmul.mubr.f32.gmra.mxu0 %v1119
    %v1121 = vpop.f32.mrf.mxu0
    %v1122 = vadd.f32 %v1027, %v1121
    %v1123 = vpop.f32.mrf.mxu0
    %1124 = vdwg.mxu0
    %1125 = vmatprep.subr.mxu0 0.0
    %1126 = vmatpush1.msra.mxu0 0.0
    %1127 = vmatprep.subr.mxu0 0.0
    %1128 = vmatpush1.msra.mxu0 0.0
    %1129 = vmatprep.subr.mxu0 0.0
    %1130 = vmatpush1.msra.mxu0 0.0
    %1131 = vmatprep.subr.mxu0 0.0
    %1132 = vmatpush1.msra.mxu0 0.0
    %1133 = vmatprep.subr.mxu0 0.0
    %1134 = vmatpush1.msra.mxu0 0.0
    %1135 = vmatprep.subr.mxu0 0.0
    %1136 = vmatpush1.msra.mxu0 0.0
    %1137 = vmatprep.subr.mxu0 0.0
    %1138 = vmatpush1.msra.mxu0 0.0
    %1139 = vmatprep.subr.mxu0 0.0
    %1140 = vmatpush1.msra.mxu0 0.0
    %1141 = vmatprep.subr.mxu0 0.0
    %1142 = vmatpush1.msra.mxu0 0.0
    %1143 = vmatprep.subr.mxu0 0.0
    %1144 = vmatpush1.msra.mxu0 0.0
    %1145 = vmatprep.subr.mxu0 0.0
    %1146 = vmatpush1.msra.mxu0 0.0
    %1147 = vmatprep.subr.mxu0 0.0
    %1148 = vmatpush1.msra.mxu0 0.0
    %1149 = vmatprep.subr.mxu0 0.0
    %1150 = vmatpush1.msra.mxu0 0.0
    %1151 = vmatprep.subr.mxu0 0.0
    %1152 = vmatpush1.msra.mxu0 0.0
    %1153 = vmatprep.subr.mxu0 0.0
    %1154 = vmatpush1.msra.mxu0 0.0
    %1155 = vmatprep.subr.mxu0 0.0
    %v1156 = vand.u32 %v828, 4294901760
    %1157 = vmatpush1.msra.mxu0 %v1156
    %1158 = vmatprep.subr.mxu0 0.0
    %1159 = vmatpush2.msra.mxu0 0.0
    %1160 = vmatprep.subr.mxu0 0.0
    %1161 = vmatpush2.msra.mxu0 0.0
    %1162 = vmatprep.subr.mxu0 0.0
    %1163 = vmatpush2.msra.mxu0 0.0
    %1164 = vmatprep.subr.mxu0 0.0
    %1165 = vmatpush2.msra.mxu0 0.0
    %1166 = vmatprep.subr.mxu0 0.0
    %1167 = vmatpush2.msra.mxu0 0.0
    %1168 = vmatprep.subr.mxu0 0.0
    %1169 = vmatpush2.msra.mxu0 0.0
    %1170 = vmatprep.subr.mxu0 0.0
    %1171 = vmatpush2.msra.mxu0 0.0
    %1172 = vmatprep.subr.mxu0 0.0
    %1173 = vmatpush2.msra.mxu0 0.0
    %1174 = vmatprep.subr.mxu0 0.0
    %1175 = vmatpush2.msra.mxu0 0.0
    %1176 = vmatprep.subr.mxu0 0.0
    %1177 = vmatpush2.msra.mxu0 0.0
    %1178 = vmatprep.subr.mxu0 0.0
    %1179 = vmatpush2.msra.mxu0 0.0
    %1180 = vmatprep.subr.mxu0 0.0
    %1181 = vmatpush2.msra.mxu0 0.0
    %1182 = vmatprep.subr.mxu0 0.0
    %1183 = vmatpush2.msra.mxu0 0.0
    %1184 = vmatprep.subr.mxu0 0.0
    %1185 = vmatpush2.msra.mxu0 0.0
    %1186 = vmatprep.subr.mxu0 0.0
    %1187 = vmatpush2.msra.mxu0 0.0
    %1188 = vmatprep.subr.mxu0 0.0
    %1189 = vmatpush2.msra.mxu0 0.0
    %1190 = vmatprep.mubr.f32.mxu0 0.0
    %v1191 = vand.u32 %v815, 4294901760
    %v1192 = vsub.f32 %v815, %v1191
    %v1193 = vand.u32 %v1192, 4294901760
    %1194 = vmatmul.mubr.f32.gmra.mxu0 %v1193
    %v1195 = vpop.f32.mrf.mxu0
    %v1196 = vadd.f32 %v1101, %v1195
    %v1197 = vpop.f32.mrf.mxu0
    %1198 = vmatprep.mubr.f32.mxu0 0.0
    %v1199 = vand.u32 %v818, 4294901760
    %v1200 = vsub.f32 %v818, %v1199
    %v1201 = vand.u32 %v1200, 4294901760
    %1202 = vmatmul.mubr.f32.gmra.mxu0 %v1201
    %v1203 = vpop.f32.mrf.mxu0
    %v1204 = vadd.f32 %v1108, %v1203
    %v1205 = vpop.f32.mrf.mxu0
    %1206 = vmatprep.mubr.f32.mxu0 0.0
    %v1207 = vand.u32 %v821, 4294901760
    %v1208 = vsub.f32 %v821, %v1207
    %v1209 = vand.u32 %v1208, 4294901760
    %1210 = vmatmul.mubr.f32.gmra.mxu0 %v1209
    %v1211 = vpop.f32.mrf.mxu0
    %v1212 = vadd.f32 %v1115, %v1211
    %v1213 = vpop.f32.mrf.mxu0
    %1214 = vmatprep.mubr.f32.mxu0 0.0
    %v1215 = vand.u32 %v824, 4294901760
    %v1216 = vsub.f32 %v824, %v1215
    %v1217 = vand.u32 %v1216, 4294901760
    %1218 = vmatmul.mubr.f32.gmra.mxu0 %v1217
    %v1219 = vpop.f32.mrf.mxu0
    %v1220 = vadd.f32 %v1122, %v1219
    %v1221 = vpop.f32.mrf.mxu0
    %1222 = vdwg.mxu0
    %1223 = vmatprep.subr.mxu0 0.0
    %1224 = vmatpush1.msra.mxu0 0.0
    %1225 = vmatprep.subr.mxu0 0.0
    %1226 = vmatpush1.msra.mxu0 0.0
    %1227 = vmatprep.subr.mxu0 0.0
    %1228 = vmatpush1.msra.mxu0 0.0
    %1229 = vmatprep.subr.mxu0 0.0
    %1230 = vmatpush1.msra.mxu0 0.0
    %1231 = vmatprep.subr.mxu0 0.0
    %1232 = vmatpush1.msra.mxu0 0.0
    %1233 = vmatprep.subr.mxu0 0.0
    %1234 = vmatpush1.msra.mxu0 0.0
    %1235 = vmatprep.subr.mxu0 0.0
    %1236 = vmatpush1.msra.mxu0 0.0
    %1237 = vmatprep.subr.mxu0 0.0
    %1238 = vmatpush1.msra.mxu0 0.0
    %1239 = vmatprep.subr.mxu0 0.0
    %1240 = vmatpush1.msra.mxu0 0.0
    %1241 = vmatprep.subr.mxu0 0.0
    %1242 = vmatpush1.msra.mxu0 0.0
    %1243 = vmatprep.subr.mxu0 0.0
    %1244 = vmatpush1.msra.mxu0 0.0
    %1245 = vmatprep.subr.mxu0 0.0
    %1246 = vmatpush1.msra.mxu0 0.0
    %1247 = vmatprep.subr.mxu0 0.0
    %1248 = vmatpush1.msra.mxu0 0.0
    %1249 = vmatprep.subr.mxu0 0.0
    %1250 = vmatpush1.msra.mxu0 0.0
    %1251 = vmatprep.subr.mxu0 0.0
    %1252 = vmatpush1.msra.mxu0 0.0
    %1253 = vmatprep.subr.mxu0 0.0
    %v1254 = vand.u32 %v828, 4294901760
    %v1255 = vsub.f32 %v828, %v1254
    %v1256 = vand.u32 %v1255, 4294901760
    %1257 = vmatpush1.msra.mxu0 %v1256
    %1258 = vmatprep.subr.mxu0 0.0
    %1259 = vmatpush2.msra.mxu0 0.0
    %1260 = vmatprep.subr.mxu0 0.0
    %1261 = vmatpush2.msra.mxu0 0.0
    %1262 = vmatprep.subr.mxu0 0.0
    %1263 = vmatpush2.msra.mxu0 0.0
    %1264 = vmatprep.subr.mxu0 0.0
    %1265 = vmatpush2.msra.mxu0 0.0
    %1266 = vmatprep.subr.mxu0 0.0
    %1267 = vmatpush2.msra.mxu0 0.0
    %1268 = vmatprep.subr.mxu0 0.0
    %1269 = vmatpush2.msra.mxu0 0.0
    %1270 = vmatprep.subr.mxu0 0.0
    %1271 = vmatpush2.msra.mxu0 0.0
    %1272 = vmatprep.subr.mxu0 0.0
    %1273 = vmatpush2.msra.mxu0 0.0
    %1274 = vmatprep.subr.mxu0 0.0
    %1275 = vmatpush2.msra.mxu0 0.0
    %1276 = vmatprep.subr.mxu0 0.0
    %1277 = vmatpush2.msra.mxu0 0.0
    %1278 = vmatprep.subr.mxu0 0.0
    %1279 = vmatpush2.msra.mxu0 0.0
    %1280 = vmatprep.subr.mxu0 0.0
    %1281 = vmatpush2.msra.mxu0 0.0
    %1282 = vmatprep.subr.mxu0 0.0
    %1283 = vmatpush2.msra.mxu0 0.0
    %1284 = vmatprep.subr.mxu0 0.0
    %1285 = vmatpush2.msra.mxu0 0.0
    %1286 = vmatprep.subr.mxu0 0.0
    %1287 = vmatpush2.msra.mxu0 0.0
    %1288 = vmatprep.subr.mxu0 0.0
    %1289 = vmatpush2.msra.mxu0 0.0
    %1290 = vmatprep.mubr.f32.mxu0 0.0
    %v1291 = vand.u32 %v815, 4294901760
    %1292 = vmatmul.mubr.f32.gmra.mxu0 %v1291
    %v1293 = vpop.f32.mrf.mxu0
    %v1294 = vadd.f32 %v1196, %v1293
    %v1295 = vpop.f32.mrf.mxu0
    %1296 = vmatprep.mubr.f32.mxu0 0.0
    %v1297 = vand.u32 %v818, 4294901760
    %1298 = vmatmul.mubr.f32.gmra.mxu0 %v1297
    %v1299 = vpop.f32.mrf.mxu0
    %v1300 = vadd.f32 %v1204, %v1299
    %v1301 = vpop.f32.mrf.mxu0
    %1302 = vmatprep.mubr.f32.mxu0 0.0
    %v1303 = vand.u32 %v821, 4294901760
    %1304 = vmatmul.mubr.f32.gmra.mxu0 %v1303
    %v1305 = vpop.f32.mrf.mxu0
    %v1306 = vadd.f32 %v1212, %v1305
    %v1307 = vpop.f32.mrf.mxu0
    %1308 = vmatprep.mubr.f32.mxu0 0.0
    %v1309 = vand.u32 %v824, 4294901760
    %1310 = vmatmul.mubr.f32.gmra.mxu0 %v1309
    %v1311 = vpop.f32.mrf.mxu0
    %v1312 = vadd.f32 %v1220, %v1311
    %v1313 = vpop.f32.mrf.mxu0
    %1314 = vdwg.mxu0
    %1315 = vmatprep.subr.mxu0 0.0
    %1316 = vmatpush1.msra.mxu0 0.0
    %1317 = vmatprep.subr.mxu0 0.0
    %1318 = vmatpush1.msra.mxu0 0.0
    %1319 = vmatprep.subr.mxu0 0.0
    %1320 = vmatpush1.msra.mxu0 0.0
    %1321 = vmatprep.subr.mxu0 0.0
    %1322 = vmatpush1.msra.mxu0 0.0
    %1323 = vmatprep.subr.mxu0 0.0
    %1324 = vmatpush1.msra.mxu0 0.0
    %1325 = vmatprep.subr.mxu0 0.0
    %1326 = vmatpush1.msra.mxu0 0.0
    %1327 = vmatprep.subr.mxu0 0.0
    %1328 = vmatpush1.msra.mxu0 0.0
    %1329 = vmatprep.subr.mxu0 0.0
    %1330 = vmatpush1.msra.mxu0 0.0
    %1331 = vmatprep.subr.mxu0 0.0
    %1332 = vmatpush1.msra.mxu0 0.0
    %1333 = vmatprep.subr.mxu0 0.0
    %1334 = vmatpush1.msra.mxu0 0.0
    %1335 = vmatprep.subr.mxu0 0.0
    %1336 = vmatpush1.msra.mxu0 0.0
    %1337 = vmatprep.subr.mxu0 0.0
    %1338 = vmatpush1.msra.mxu0 0.0
    %1339 = vmatprep.subr.mxu0 0.0
    %1340 = vmatpush1.msra.mxu0 0.0
    %1341 = vmatprep.subr.mxu0 0.0
    %1342 = vmatpush1.msra.mxu0 0.0
    %1343 = vmatprep.subr.mxu0 0.0
    %1344 = vmatpush1.msra.mxu0 0.0
    %1345 = vmatprep.subr.mxu0 0.0
    %v1346 = vand.u32 %v828, 4294901760
    %1347 = vmatpush1.msra.mxu0 %v1346
    %1348 = vmatprep.subr.mxu0 0.0
    %1349 = vmatpush2.msra.mxu0 0.0
    %1350 = vmatprep.subr.mxu0 0.0
    %1351 = vmatpush2.msra.mxu0 0.0
    %1352 = vmatprep.subr.mxu0 0.0
    %1353 = vmatpush2.msra.mxu0 0.0
    %1354 = vmatprep.subr.mxu0 0.0
    %1355 = vmatpush2.msra.mxu0 0.0
    %1356 = vmatprep.subr.mxu0 0.0
    %1357 = vmatpush2.msra.mxu0 0.0
    %1358 = vmatprep.subr.mxu0 0.0
    %1359 = vmatpush2.msra.mxu0 0.0
    %1360 = vmatprep.subr.mxu0 0.0
    %1361 = vmatpush2.msra.mxu0 0.0
    %1362 = vmatprep.subr.mxu0 0.0
    %1363 = vmatpush2.msra.mxu0 0.0
    %1364 = vmatprep.subr.mxu0 0.0
    %1365 = vmatpush2.msra.mxu0 0.0
    %1366 = vmatprep.subr.mxu0 0.0
    %1367 = vmatpush2.msra.mxu0 0.0
    %1368 = vmatprep.subr.mxu0 0.0
    %1369 = vmatpush2.msra.mxu0 0.0
    %1370 = vmatprep.subr.mxu0 0.0
    %1371 = vmatpush2.msra.mxu0 0.0
    %1372 = vmatprep.subr.mxu0 0.0
    %1373 = vmatpush2.msra.mxu0 0.0
    %1374 = vmatprep.subr.mxu0 0.0
    %1375 = vmatpush2.msra.mxu0 0.0
    %1376 = vmatprep.subr.mxu0 0.0
    %1377 = vmatpush2.msra.mxu0 0.0
    %1378 = vmatprep.subr.mxu0 0.0
    %1379 = vmatpush2.msra.mxu0 0.0
    %1380 = vmatprep.mubr.f32.mxu0 0.0
    %v1381 = vand.u32 %v815, 4294901760
    %1382 = vmatmul.mubr.f32.gmra.mxu0 %v1381
    %v1383 = vpop.f32.mrf.mxu0
    %v1384 = vadd.f32 %v1294, %v1383
    %v1385 = vpop.f32.mrf.mxu0
    %1386 = vmatprep.mubr.f32.mxu0 0.0
    %v1387 = vand.u32 %v818, 4294901760
    %1388 = vmatmul.mubr.f32.gmra.mxu0 %v1387
    %v1389 = vpop.f32.mrf.mxu0
    %v1390 = vadd.f32 %v1300, %v1389
    %v1391 = vpop.f32.mrf.mxu0
    %1392 = vmatprep.mubr.f32.mxu0 0.0
    %v1393 = vand.u32 %v821, 4294901760
    %1394 = vmatmul.mubr.f32.gmra.mxu0 %v1393
    %v1395 = vpop.f32.mrf.mxu0
    %v1396 = vadd.f32 %v1306, %v1395
    %v1397 = vpop.f32.mrf.mxu0
    %1398 = vmatprep.mubr.f32.mxu0 0.0
    %v1399 = vand.u32 %v824, 4294901760
    %1400 = vmatmul.mubr.f32.gmra.mxu0 %v1399
    %v1401 = vpop.f32.mrf.mxu0
    %v1402 = vadd.f32 %v1312, %v1401
    %v1403 = vpop.f32.mrf.mxu0
    %1404 = vdwg.mxu0
    %v1405 = vsub.f32 %v18, %v1384
    %v1406 = vsub.f32 %v19, %v1390
    %v1407 = vsub.f32 %v20, %v1396
    %v1408 = vsub.f32 %v21, %v1402
    %v1409 = vmul.f32 %v1405, %v1405
    %v1410 = vmul.f32 %v1406, %v1406
    %v1411 = vmul.f32 %v1407, %v1407
    %v1412 = vmul.f32 %v1408, %v1408
    %1413 = vmatprep.subr.mxu0 0.0
    %v1414 = vand.u32 %v37, 4294901760
    %1415 = vmatpush1.msra.mxu0 %v1414
    %1416 = vmatprep.subr.mxu0 0.0
    %v1417 = vand.u32 %v36, 4294901760
    %1418 = vmatpush1.msra.mxu0 %v1417
    %1419 = vmatprep.subr.mxu0 0.0
    %v1420 = vand.u32 %v35, 4294901760
    %1421 = vmatpush1.msra.mxu0 %v1420
    %1422 = vmatprep.subr.mxu0 0.0
    %v1423 = vand.u32 %v34, 4294901760
    %1424 = vmatpush1.msra.mxu0 %v1423
    %1425 = vmatprep.subr.mxu0 0.0
    %v1426 = vand.u32 %v33, 4294901760
    %1427 = vmatpush1.msra.mxu0 %v1426
    %1428 = vmatprep.subr.mxu0 0.0
    %v1429 = vand.u32 %v32, 4294901760
    %1430 = vmatpush1.msra.mxu0 %v1429
    %1431 = vmatprep.subr.mxu0 0.0
    %v1432 = vand.u32 %v31, 4294901760
    %1433 = vmatpush1.msra.mxu0 %v1432
    %1434 = vmatprep.subr.mxu0 0.0
    %v1435 = vand.u32 %v30, 4294901760
    %1436 = vmatpush1.msra.mxu0 %v1435
    %1437 = vmatprep.subr.mxu0 0.0
    %v1438 = vand.u32 %v29, 4294901760
    %1439 = vmatpush1.msra.mxu0 %v1438
    %1440 = vmatprep.subr.mxu0 0.0
    %v1441 = vand.u32 %v28, 4294901760
    %1442 = vmatpush1.msra.mxu0 %v1441
    %1443 = vmatprep.subr.mxu0 0.0
    %v1444 = vand.u32 %v27, 4294901760
    %1445 = vmatpush1.msra.mxu0 %v1444
    %1446 = vmatprep.subr.mxu0 0.0
    %v1447 = vand.u32 %v26, 4294901760
    %1448 = vmatpush1.msra.mxu0 %v1447
    %1449 = vmatprep.subr.mxu0 0.0
    %v1450 = vand.u32 %v25, 4294901760
    %1451 = vmatpush1.msra.mxu0 %v1450
    %1452 = vmatprep.subr.mxu0 0.0
    %v1453 = vand.u32 %v24, 4294901760
    %1454 = vmatpush1.msra.mxu0 %v1453
    %1455 = vmatprep.subr.mxu0 0.0
    %v1456 = vand.u32 %v23, 4294901760
    %1457 = vmatpush1.msra.mxu0 %v1456
    %1458 = vmatprep.subr.mxu0 0.0
    %v1459 = vand.u32 %v22, 4294901760
    %1460 = vmatpush1.msra.mxu0 %v1459
    %1461 = vmatprep.subr.mxu0 0.0
    %1462 = vmatpush2.msra.mxu0 0.0
    %1463 = vmatprep.subr.mxu0 0.0
    %1464 = vmatpush2.msra.mxu0 0.0
    %1465 = vmatprep.subr.mxu0 0.0
    %1466 = vmatpush2.msra.mxu0 0.0
    %1467 = vmatprep.subr.mxu0 0.0
    %1468 = vmatpush2.msra.mxu0 0.0
    %1469 = vmatprep.subr.mxu0 0.0
    %1470 = vmatpush2.msra.mxu0 0.0
    %1471 = vmatprep.subr.mxu0 0.0
    %1472 = vmatpush2.msra.mxu0 0.0
    %1473 = vmatprep.subr.mxu0 0.0
    %1474 = vmatpush2.msra.mxu0 0.0
    %1475 = vmatprep.subr.mxu0 0.0
    %1476 = vmatpush2.msra.mxu0 0.0
    %1477 = vmatprep.subr.mxu0 0.0
    %1478 = vmatpush2.msra.mxu0 0.0
    %1479 = vmatprep.subr.mxu0 0.0
    %1480 = vmatpush2.msra.mxu0 0.0
    %1481 = vmatprep.subr.mxu0 0.0
    %1482 = vmatpush2.msra.mxu0 0.0
    %1483 = vmatprep.subr.mxu0 0.0
    %1484 = vmatpush2.msra.mxu0 0.0
    %1485 = vmatprep.subr.mxu0 0.0
    %1486 = vmatpush2.msra.mxu0 0.0
    %1487 = vmatprep.subr.mxu0 0.0
    %1488 = vmatpush2.msra.mxu0 0.0
    %1489 = vmatprep.subr.mxu0 0.0
    %1490 = vmatpush2.msra.mxu0 0.0
    %1491 = vmatprep.subr.mxu0 0.0
    %1492 = vmatpush2.msra.mxu0 0.0
    %1493 = vmatprep.mubr.f32.mxu0 0.0
    %v1494 = vand.u32 %v1409, 4294901760
    %v1495 = vsub.f32 %v1409, %v1494
    %v1496 = vand.u32 %v1495, 4294901760
    %v1497 = vsub.f32 %v1495, %v1496
    %v1498 = vand.u32 %v1497, 4294901760
    %1499 = vmatmul.mubr.f32.gmra.mxu0 %v1498
    %v1500 = vpop.f32.mrf.mxu0
    %v1501 = vadd.f32 0.0, %v1500
    %v1502 = vpop.f32.mrf.mxu0
    %1503 = vmatprep.mubr.f32.mxu0 0.0
    %v1504 = vand.u32 %v1410, 4294901760
    %v1505 = vsub.f32 %v1410, %v1504
    %v1506 = vand.u32 %v1505, 4294901760
    %v1507 = vsub.f32 %v1505, %v1506
    %v1508 = vand.u32 %v1507, 4294901760
    %1509 = vmatmul.mubr.f32.gmra.mxu0 %v1508
    %v1510 = vpop.f32.mrf.mxu0
    %v1511 = vadd.f32 0.0, %v1510
    %v1512 = vpop.f32.mrf.mxu0
    %1513 = vmatprep.mubr.f32.mxu0 0.0
    %v1514 = vand.u32 %v1411, 4294901760
    %v1515 = vsub.f32 %v1411, %v1514
    %v1516 = vand.u32 %v1515, 4294901760
    %v1517 = vsub.f32 %v1515, %v1516
    %v1518 = vand.u32 %v1517, 4294901760
    %1519 = vmatmul.mubr.f32.gmra.mxu0 %v1518
    %v1520 = vpop.f32.mrf.mxu0
    %v1521 = vadd.f32 0.0, %v1520
    %v1522 = vpop.f32.mrf.mxu0
    %1523 = vmatprep.mubr.f32.mxu0 0.0
    %v1524 = vand.u32 %v1412, 4294901760
    %v1525 = vsub.f32 %v1412, %v1524
    %v1526 = vand.u32 %v1525, 4294901760
    %v1527 = vsub.f32 %v1525, %v1526
    %v1528 = vand.u32 %v1527, 4294901760
    %1529 = vmatmul.mubr.f32.gmra.mxu0 %v1528
    %v1530 = vpop.f32.mrf.mxu0
    %v1531 = vadd.f32 0.0, %v1530
    %v1532 = vpop.f32.mrf.mxu0
    %1533 = vdwg.mxu0
    %1534 = vmatprep.subr.mxu0 0.0
    %v1535 = vand.u32 %v37, 4294901760
    %v1536 = vsub.f32 %v37, %v1535
    %v1537 = vand.u32 %v1536, 4294901760
    %v1538 = vsub.f32 %v1536, %v1537
    %v1539 = vand.u32 %v1538, 4294901760
    %1540 = vmatpush1.msra.mxu0 %v1539
    %1541 = vmatprep.subr.mxu0 0.0
    %v1542 = vand.u32 %v36, 4294901760
    %v1543 = vsub.f32 %v36, %v1542
    %v1544 = vand.u32 %v1543, 4294901760
    %v1545 = vsub.f32 %v1543, %v1544
    %v1546 = vand.u32 %v1545, 4294901760
    %1547 = vmatpush1.msra.mxu0 %v1546
    %1548 = vmatprep.subr.mxu0 0.0
    %v1549 = vand.u32 %v35, 4294901760
    %v1550 = vsub.f32 %v35, %v1549
    %v1551 = vand.u32 %v1550, 4294901760
    %v1552 = vsub.f32 %v1550, %v1551
    %v1553 = vand.u32 %v1552, 4294901760
    %1554 = vmatpush1.msra.mxu0 %v1553
    %1555 = vmatprep.subr.mxu0 0.0
    %v1556 = vand.u32 %v34, 4294901760
    %v1557 = vsub.f32 %v34, %v1556
    %v1558 = vand.u32 %v1557, 4294901760
    %v1559 = vsub.f32 %v1557, %v1558
    %v1560 = vand.u32 %v1559, 4294901760
    %1561 = vmatpush1.msra.mxu0 %v1560
    %1562 = vmatprep.subr.mxu0 0.0
    %v1563 = vand.u32 %v33, 4294901760
    %v1564 = vsub.f32 %v33, %v1563
    %v1565 = vand.u32 %v1564, 4294901760
    %v1566 = vsub.f32 %v1564, %v1565
    %v1567 = vand.u32 %v1566, 4294901760
    %1568 = vmatpush1.msra.mxu0 %v1567
    %1569 = vmatprep.subr.mxu0 0.0
    %v1570 = vand.u32 %v32, 4294901760
    %v1571 = vsub.f32 %v32, %v1570
    %v1572 = vand.u32 %v1571, 4294901760
    %v1573 = vsub.f32 %v1571, %v1572
    %v1574 = vand.u32 %v1573, 4294901760
    %1575 = vmatpush1.msra.mxu0 %v1574
    %1576 = vmatprep.subr.mxu0 0.0
    %v1577 = vand.u32 %v31, 4294901760
    %v1578 = vsub.f32 %v31, %v1577
    %v1579 = vand.u32 %v1578, 4294901760
    %v1580 = vsub.f32 %v1578, %v1579
    %v1581 = vand.u32 %v1580, 4294901760
    %1582 = vmatpush1.msra.mxu0 %v1581
    %1583 = vmatprep.subr.mxu0 0.0
    %v1584 = vand.u32 %v30, 4294901760
    %v1585 = vsub.f32 %v30, %v1584
    %v1586 = vand.u32 %v1585, 4294901760
    %v1587 = vsub.f32 %v1585, %v1586
    %v1588 = vand.u32 %v1587, 4294901760
    %1589 = vmatpush1.msra.mxu0 %v1588
    %1590 = vmatprep.subr.mxu0 0.0
    %v1591 = vand.u32 %v29, 4294901760
    %v1592 = vsub.f32 %v29, %v1591
    %v1593 = vand.u32 %v1592, 4294901760
    %v1594 = vsub.f32 %v1592, %v1593
    %v1595 = vand.u32 %v1594, 4294901760
    %1596 = vmatpush1.msra.mxu0 %v1595
    %1597 = vmatprep.subr.mxu0 0.0
    %v1598 = vand.u32 %v28, 4294901760
    %v1599 = vsub.f32 %v28, %v1598
    %v1600 = vand.u32 %v1599, 4294901760
    %v1601 = vsub.f32 %v1599, %v1600
    %v1602 = vand.u32 %v1601, 4294901760
    %1603 = vmatpush1.msra.mxu0 %v1602
    %1604 = vmatprep.subr.mxu0 0.0
    %v1605 = vand.u32 %v27, 4294901760
    %v1606 = vsub.f32 %v27, %v1605
    %v1607 = vand.u32 %v1606, 4294901760
    %v1608 = vsub.f32 %v1606, %v1607
    %v1609 = vand.u32 %v1608, 4294901760
    %1610 = vmatpush1.msra.mxu0 %v1609
    %1611 = vmatprep.subr.mxu0 0.0
    %v1612 = vand.u32 %v26, 4294901760
    %v1613 = vsub.f32 %v26, %v1612
    %v1614 = vand.u32 %v1613, 4294901760
    %v1615 = vsub.f32 %v1613, %v1614
    %v1616 = vand.u32 %v1615, 4294901760
    %1617 = vmatpush1.msra.mxu0 %v1616
    %1618 = vmatprep.subr.mxu0 0.0
    %v1619 = vand.u32 %v25, 4294901760
    %v1620 = vsub.f32 %v25, %v1619
    %v1621 = vand.u32 %v1620, 4294901760
    %v1622 = vsub.f32 %v1620, %v1621
    %v1623 = vand.u32 %v1622, 4294901760
    %1624 = vmatpush1.msra.mxu0 %v1623
    %1625 = vmatprep.subr.mxu0 0.0
    %v1626 = vand.u32 %v24, 4294901760
    %v1627 = vsub.f32 %v24, %v1626
    %v1628 = vand.u32 %v1627, 4294901760
    %v1629 = vsub.f32 %v1627, %v1628
    %v1630 = vand.u32 %v1629, 4294901760
    %1631 = vmatpush1.msra.mxu0 %v1630
    %1632 = vmatprep.subr.mxu0 0.0
    %v1633 = vand.u32 %v23, 4294901760
    %v1634 = vsub.f32 %v23, %v1633
    %v1635 = vand.u32 %v1634, 4294901760
    %v1636 = vsub.f32 %v1634, %v1635
    %v1637 = vand.u32 %v1636, 4294901760
    %1638 = vmatpush1.msra.mxu0 %v1637
    %1639 = vmatprep.subr.mxu0 0.0
    %v1640 = vand.u32 %v22, 4294901760
    %v1641 = vsub.f32 %v22, %v1640
    %v1642 = vand.u32 %v1641, 4294901760
    %v1643 = vsub.f32 %v1641, %v1642
    %v1644 = vand.u32 %v1643, 4294901760
    %1645 = vmatpush1.msra.mxu0 %v1644
    %1646 = vmatprep.subr.mxu0 0.0
    %1647 = vmatpush2.msra.mxu0 0.0
    %1648 = vmatprep.subr.mxu0 0.0
    %1649 = vmatpush2.msra.mxu0 0.0
    %1650 = vmatprep.subr.mxu0 0.0
    %1651 = vmatpush2.msra.mxu0 0.0
    %1652 = vmatprep.subr.mxu0 0.0
    %1653 = vmatpush2.msra.mxu0 0.0
    %1654 = vmatprep.subr.mxu0 0.0
    %1655 = vmatpush2.msra.mxu0 0.0
    %1656 = vmatprep.subr.mxu0 0.0
    %1657 = vmatpush2.msra.mxu0 0.0
    %1658 = vmatprep.subr.mxu0 0.0
    %1659 = vmatpush2.msra.mxu0 0.0
    %1660 = vmatprep.subr.mxu0 0.0
    %1661 = vmatpush2.msra.mxu0 0.0
    %1662 = vmatprep.subr.mxu0 0.0
    %1663 = vmatpush2.msra.mxu0 0.0
    %1664 = vmatprep.subr.mxu0 0.0
    %1665 = vmatpush2.msra.mxu0 0.0
    %1666 = vmatprep.subr.mxu0 0.0
    %1667 = vmatpush2.msra.mxu0 0.0
    %1668 = vmatprep.subr.mxu0 0.0
    %1669 = vmatpush2.msra.mxu0 0.0
    %1670 = vmatprep.subr.mxu0 0.0
    %1671 = vmatpush2.msra.mxu0 0.0
    %1672 = vmatprep.subr.mxu0 0.0
    %1673 = vmatpush2.msra.mxu0 0.0
    %1674 = vmatprep.subr.mxu0 0.0
    %1675 = vmatpush2.msra.mxu0 0.0
    %1676 = vmatprep.subr.mxu0 0.0
    %1677 = vmatpush2.msra.mxu0 0.0
    %1678 = vmatprep.mubr.f32.mxu0 0.0
    %v1679 = vand.u32 %v1409, 4294901760
    %1680 = vmatmul.mubr.f32.gmra.mxu0 %v1679
    %v1681 = vpop.f32.mrf.mxu0
    %v1682 = vadd.f32 %v1501, %v1681
    %v1683 = vpop.f32.mrf.mxu0
    %1684 = vmatprep.mubr.f32.mxu0 0.0
    %v1685 = vand.u32 %v1410, 4294901760
    %1686 = vmatmul.mubr.f32.gmra.mxu0 %v1685
    %v1687 = vpop.f32.mrf.mxu0
    %v1688 = vadd.f32 %v1511, %v1687
    %v1689 = vpop.f32.mrf.mxu0
    %1690 = vmatprep.mubr.f32.mxu0 0.0
    %v1691 = vand.u32 %v1411, 4294901760
    %1692 = vmatmul.mubr.f32.gmra.mxu0 %v1691
    %v1693 = vpop.f32.mrf.mxu0
    %v1694 = vadd.f32 %v1521, %v1693
    %v1695 = vpop.f32.mrf.mxu0
    %1696 = vmatprep.mubr.f32.mxu0 0.0
    %v1697 = vand.u32 %v1412, 4294901760
    %1698 = vmatmul.mubr.f32.gmra.mxu0 %v1697
    %v1699 = vpop.f32.mrf.mxu0
    %v1700 = vadd.f32 %v1531, %v1699
    %v1701 = vpop.f32.mrf.mxu0
    %1702 = vdwg.mxu0
    %1703 = vmatprep.subr.mxu0 0.0
    %v1704 = vand.u32 %v37, 4294901760
    %v1705 = vsub.f32 %v37, %v1704
    %1706 = vmatpush1.msra.mxu0 %v1705
    %1707 = vmatprep.subr.mxu0 0.0
    %v1708 = vand.u32 %v36, 4294901760
    %v1709 = vsub.f32 %v36, %v1708
    %1710 = vmatpush1.msra.mxu0 %v1709
    %1711 = vmatprep.subr.mxu0 0.0
    %v1712 = vand.u32 %v35, 4294901760
    %v1713 = vsub.f32 %v35, %v1712
    %1714 = vmatpush1.msra.mxu0 %v1713
    %1715 = vmatprep.subr.mxu0 0.0
    %v1716 = vand.u32 %v34, 4294901760
    %v1717 = vsub.f32 %v34, %v1716
    %1718 = vmatpush1.msra.mxu0 %v1717
    %1719 = vmatprep.subr.mxu0 0.0
    %v1720 = vand.u32 %v33, 4294901760
    %v1721 = vsub.f32 %v33, %v1720
    %1722 = vmatpush1.msra.mxu0 %v1721
    %1723 = vmatprep.subr.mxu0 0.0
    %v1724 = vand.u32 %v32, 4294901760
    %v1725 = vsub.f32 %v32, %v1724
    %1726 = vmatpush1.msra.mxu0 %v1725
    %1727 = vmatprep.subr.mxu0 0.0
    %v1728 = vand.u32 %v31, 4294901760
    %v1729 = vsub.f32 %v31, %v1728
    %1730 = vmatpush1.msra.mxu0 %v1729
    %1731 = vmatprep.subr.mxu0 0.0
    %v1732 = vand.u32 %v30, 4294901760
    %v1733 = vsub.f32 %v30, %v1732
    %1734 = vmatpush1.msra.mxu0 %v1733
    %1735 = vmatprep.subr.mxu0 0.0
    %v1736 = vand.u32 %v29, 4294901760
    %v1737 = vsub.f32 %v29, %v1736
    %1738 = vmatpush1.msra.mxu0 %v1737
    %1739 = vmatprep.subr.mxu0 0.0
    %v1740 = vand.u32 %v28, 4294901760
    %v1741 = vsub.f32 %v28, %v1740
    %1742 = vmatpush1.msra.mxu0 %v1741
    %1743 = vmatprep.subr.mxu0 0.0
    %v1744 = vand.u32 %v27, 4294901760
    %v1745 = vsub.f32 %v27, %v1744
    %1746 = vmatpush1.msra.mxu0 %v1745
    %1747 = vmatprep.subr.mxu0 0.0
    %v1748 = vand.u32 %v26, 4294901760
    %v1749 = vsub.f32 %v26, %v1748
    %1750 = vmatpush1.msra.mxu0 %v1749
    %1751 = vmatprep.subr.mxu0 0.0
    %v1752 = vand.u32 %v25, 4294901760
    %v1753 = vsub.f32 %v25, %v1752
    %1754 = vmatpush1.msra.mxu0 %v1753
    %1755 = vmatprep.subr.mxu0 0.0
    %v1756 = vand.u32 %v24, 4294901760
    %v1757 = vsub.f32 %v24, %v1756
    %1758 = vmatpush1.msra.mxu0 %v1757
    %1759 = vmatprep.subr.mxu0 0.0
    %v1760 = vand.u32 %v23, 4294901760
    %v1761 = vsub.f32 %v23, %v1760
    %1762 = vmatpush1.msra.mxu0 %v1761
    %1763 = vmatprep.subr.mxu0 0.0
    %v1764 = vand.u32 %v22, 4294901760
    %v1765 = vsub.f32 %v22, %v1764
    %1766 = vmatpush1.msra.mxu0 %v1765
    %1767 = vmatprep.subr.mxu0 0.0
    %1768 = vmatpush2.msra.mxu0 0.0
    %1769 = vmatprep.subr.mxu0 0.0
    %1770 = vmatpush2.msra.mxu0 0.0
    %1771 = vmatprep.subr.mxu0 0.0
    %1772 = vmatpush2.msra.mxu0 0.0
    %1773 = vmatprep.subr.mxu0 0.0
    %1774 = vmatpush2.msra.mxu0 0.0
    %1775 = vmatprep.subr.mxu0 0.0
    %1776 = vmatpush2.msra.mxu0 0.0
    %1777 = vmatprep.subr.mxu0 0.0
    %1778 = vmatpush2.msra.mxu0 0.0
    %1779 = vmatprep.subr.mxu0 0.0
    %1780 = vmatpush2.msra.mxu0 0.0
    %1781 = vmatprep.subr.mxu0 0.0
    %1782 = vmatpush2.msra.mxu0 0.0
    %1783 = vmatprep.subr.mxu0 0.0
    %1784 = vmatpush2.msra.mxu0 0.0
    %1785 = vmatprep.subr.mxu0 0.0
    %1786 = vmatpush2.msra.mxu0 0.0
    %1787 = vmatprep.subr.mxu0 0.0
    %1788 = vmatpush2.msra.mxu0 0.0
    %1789 = vmatprep.subr.mxu0 0.0
    %1790 = vmatpush2.msra.mxu0 0.0
    %1791 = vmatprep.subr.mxu0 0.0
    %1792 = vmatpush2.msra.mxu0 0.0
    %1793 = vmatprep.subr.mxu0 0.0
    %1794 = vmatpush2.msra.mxu0 0.0
    %1795 = vmatprep.subr.mxu0 0.0
    %1796 = vmatpush2.msra.mxu0 0.0
    %1797 = vmatprep.subr.mxu0 0.0
    %1798 = vmatpush2.msra.mxu0 0.0
    %1799 = vmatprep.mubr.f32.mxu0 0.0
    %v1800 = vand.u32 %v1409, 4294901760
    %v1801 = vsub.f32 %v1409, %v1800
    %1802 = vmatmul.mubr.f32.gmra.mxu0 %v1801
    %v1803 = vpop.f32.mrf.mxu0
    %v1804 = vadd.f32 %v1682, %v1803
    %v1805 = vpop.f32.mrf.mxu0
    %1806 = vmatprep.mubr.f32.mxu0 0.0
    %v1807 = vand.u32 %v1410, 4294901760
    %v1808 = vsub.f32 %v1410, %v1807
    %1809 = vmatmul.mubr.f32.gmra.mxu0 %v1808
    %v1810 = vpop.f32.mrf.mxu0
    %v1811 = vadd.f32 %v1688, %v1810
    %v1812 = vpop.f32.mrf.mxu0
    %1813 = vmatprep.mubr.f32.mxu0 0.0
    %v1814 = vand.u32 %v1411, 4294901760
    %v1815 = vsub.f32 %v1411, %v1814
    %1816 = vmatmul.mubr.f32.gmra.mxu0 %v1815
    %v1817 = vpop.f32.mrf.mxu0
    %v1818 = vadd.f32 %v1694, %v1817
    %v1819 = vpop.f32.mrf.mxu0
    %1820 = vmatprep.mubr.f32.mxu0 0.0
    %v1821 = vand.u32 %v1412, 4294901760
    %v1822 = vsub.f32 %v1412, %v1821
    %1823 = vmatmul.mubr.f32.gmra.mxu0 %v1822
    %v1824 = vpop.f32.mrf.mxu0
    %v1825 = vadd.f32 %v1700, %v1824
    %v1826 = vpop.f32.mrf.mxu0
    %1827 = vdwg.mxu0
    %1828 = vmatprep.subr.mxu0 0.0
    %v1829 = vand.u32 %v37, 4294901760
    %1830 = vmatpush1.msra.mxu0 %v1829
    %1831 = vmatprep.subr.mxu0 0.0
    %v1832 = vand.u32 %v36, 4294901760
    %1833 = vmatpush1.msra.mxu0 %v1832
    %1834 = vmatprep.subr.mxu0 0.0
    %v1835 = vand.u32 %v35, 4294901760
    %1836 = vmatpush1.msra.mxu0 %v1835
    %1837 = vmatprep.subr.mxu0 0.0
    %v1838 = vand.u32 %v34, 4294901760
    %1839 = vmatpush1.msra.mxu0 %v1838
    %1840 = vmatprep.subr.mxu0 0.0
    %v1841 = vand.u32 %v33, 4294901760
    %1842 = vmatpush1.msra.mxu0 %v1841
    %1843 = vmatprep.subr.mxu0 0.0
    %v1844 = vand.u32 %v32, 4294901760
    %1845 = vmatpush1.msra.mxu0 %v1844
    %1846 = vmatprep.subr.mxu0 0.0
    %v1847 = vand.u32 %v31, 4294901760
    %1848 = vmatpush1.msra.mxu0 %v1847
    %1849 = vmatprep.subr.mxu0 0.0
    %v1850 = vand.u32 %v30, 4294901760
    %1851 = vmatpush1.msra.mxu0 %v1850
    %1852 = vmatprep.subr.mxu0 0.0
    %v1853 = vand.u32 %v29, 4294901760
    %1854 = vmatpush1.msra.mxu0 %v1853
    %1855 = vmatprep.subr.mxu0 0.0
    %v1856 = vand.u32 %v28, 4294901760
    %1857 = vmatpush1.msra.mxu0 %v1856
    %1858 = vmatprep.subr.mxu0 0.0
    %v1859 = vand.u32 %v27, 4294901760
    %1860 = vmatpush1.msra.mxu0 %v1859
    %1861 = vmatprep.subr.mxu0 0.0
    %v1862 = vand.u32 %v26, 4294901760
    %1863 = vmatpush1.msra.mxu0 %v1862
    %1864 = vmatprep.subr.mxu0 0.0
    %v1865 = vand.u32 %v25, 4294901760
    %1866 = vmatpush1.msra.mxu0 %v1865
    %1867 = vmatprep.subr.mxu0 0.0
    %v1868 = vand.u32 %v24, 4294901760
    %1869 = vmatpush1.msra.mxu0 %v1868
    %1870 = vmatprep.subr.mxu0 0.0
    %v1871 = vand.u32 %v23, 4294901760
    %1872 = vmatpush1.msra.mxu0 %v1871
    %1873 = vmatprep.subr.mxu0 0.0
    %v1874 = vand.u32 %v22, 4294901760
    %1875 = vmatpush1.msra.mxu0 %v1874
    %1876 = vmatprep.subr.mxu0 0.0
    %1877 = vmatpush2.msra.mxu0 0.0
    %1878 = vmatprep.subr.mxu0 0.0
    %1879 = vmatpush2.msra.mxu0 0.0
    %1880 = vmatprep.subr.mxu0 0.0
    %1881 = vmatpush2.msra.mxu0 0.0
    %1882 = vmatprep.subr.mxu0 0.0
    %1883 = vmatpush2.msra.mxu0 0.0
    %1884 = vmatprep.subr.mxu0 0.0
    %1885 = vmatpush2.msra.mxu0 0.0
    %1886 = vmatprep.subr.mxu0 0.0
    %1887 = vmatpush2.msra.mxu0 0.0
    %1888 = vmatprep.subr.mxu0 0.0
    %1889 = vmatpush2.msra.mxu0 0.0
    %1890 = vmatprep.subr.mxu0 0.0
    %1891 = vmatpush2.msra.mxu0 0.0
    %1892 = vmatprep.subr.mxu0 0.0
    %1893 = vmatpush2.msra.mxu0 0.0
    %1894 = vmatprep.subr.mxu0 0.0
    %1895 = vmatpush2.msra.mxu0 0.0
    %1896 = vmatprep.subr.mxu0 0.0
    %1897 = vmatpush2.msra.mxu0 0.0
    %1898 = vmatprep.subr.mxu0 0.0
    %1899 = vmatpush2.msra.mxu0 0.0
    %1900 = vmatprep.subr.mxu0 0.0
    %1901 = vmatpush2.msra.mxu0 0.0
    %1902 = vmatprep.subr.mxu0 0.0
    %1903 = vmatpush2.msra.mxu0 0.0
    %1904 = vmatprep.subr.mxu0 0.0
    %1905 = vmatpush2.msra.mxu0 0.0
    %1906 = vmatprep.subr.mxu0 0.0
    %1907 = vmatpush2.msra.mxu0 0.0
    %1908 = vmatprep.mubr.f32.mxu0 0.0
    %v1909 = vand.u32 %v1409, 4294901760
    %v1910 = vsub.f32 %v1409, %v1909
    %v1911 = vand.u32 %v1910, 4294901760
    %1912 = vmatmul.mubr.f32.gmra.mxu0 %v1911
    %v1913 = vpop.f32.mrf.mxu0
    %v1914 = vadd.f32 %v1804, %v1913
    %v1915 = vpop.f32.mrf.mxu0
    %1916 = vmatprep.mubr.f32.mxu0 0.0
    %v1917 = vand.u32 %v1410, 4294901760
    %v1918 = vsub.f32 %v1410, %v1917
    %v1919 = vand.u32 %v1918, 4294901760
    %1920 = vmatmul.mubr.f32.gmra.mxu0 %v1919
    %v1921 = vpop.f32.mrf.mxu0
    %v1922 = vadd.f32 %v1811, %v1921
    %v1923 = vpop.f32.mrf.mxu0
    %1924 = vmatprep.mubr.f32.mxu0 0.0
    %v1925 = vand.u32 %v1411, 4294901760
    %v1926 = vsub.f32 %v1411, %v1925
    %v1927 = vand.u32 %v1926, 4294901760
    %1928 = vmatmul.mubr.f32.gmra.mxu0 %v1927
    %v1929 = vpop.f32.mrf.mxu0
    %v1930 = vadd.f32 %v1818, %v1929
    %v1931 = vpop.f32.mrf.mxu0
    %1932 = vmatprep.mubr.f32.mxu0 0.0
    %v1933 = vand.u32 %v1412, 4294901760
    %v1934 = vsub.f32 %v1412, %v1933
    %v1935 = vand.u32 %v1934, 4294901760
    %1936 = vmatmul.mubr.f32.gmra.mxu0 %v1935
    %v1937 = vpop.f32.mrf.mxu0
    %v1938 = vadd.f32 %v1825, %v1937
    %v1939 = vpop.f32.mrf.mxu0
    %1940 = vdwg.mxu0
    %1941 = vmatprep.subr.mxu0 0.0
    %v1942 = vand.u32 %v37, 4294901760
    %v1943 = vsub.f32 %v37, %v1942
    %v1944 = vand.u32 %v1943, 4294901760
    %1945 = vmatpush1.msra.mxu0 %v1944
    %1946 = vmatprep.subr.mxu0 0.0
    %v1947 = vand.u32 %v36, 4294901760
    %v1948 = vsub.f32 %v36, %v1947
    %v1949 = vand.u32 %v1948, 4294901760
    %1950 = vmatpush1.msra.mxu0 %v1949
    %1951 = vmatprep.subr.mxu0 0.0
    %v1952 = vand.u32 %v35, 4294901760
    %v1953 = vsub.f32 %v35, %v1952
    %v1954 = vand.u32 %v1953, 4294901760
    %1955 = vmatpush1.msra.mxu0 %v1954
    %1956 = vmatprep.subr.mxu0 0.0
    %v1957 = vand.u32 %v34, 4294901760
    %v1958 = vsub.f32 %v34, %v1957
    %v1959 = vand.u32 %v1958, 4294901760
    %1960 = vmatpush1.msra.mxu0 %v1959
    %1961 = vmatprep.subr.mxu0 0.0
    %v1962 = vand.u32 %v33, 4294901760
    %v1963 = vsub.f32 %v33, %v1962
    %v1964 = vand.u32 %v1963, 4294901760
    %1965 = vmatpush1.msra.mxu0 %v1964
    %1966 = vmatprep.subr.mxu0 0.0
    %v1967 = vand.u32 %v32, 4294901760
    %v1968 = vsub.f32 %v32, %v1967
    %v1969 = vand.u32 %v1968, 4294901760
    %1970 = vmatpush1.msra.mxu0 %v1969
    %1971 = vmatprep.subr.mxu0 0.0
    %v1972 = vand.u32 %v31, 4294901760
    %v1973 = vsub.f32 %v31, %v1972
    %v1974 = vand.u32 %v1973, 4294901760
    %1975 = vmatpush1.msra.mxu0 %v1974
    %1976 = vmatprep.subr.mxu0 0.0
    %v1977 = vand.u32 %v30, 4294901760
    %v1978 = vsub.f32 %v30, %v1977
    %v1979 = vand.u32 %v1978, 4294901760
    %1980 = vmatpush1.msra.mxu0 %v1979
    %1981 = vmatprep.subr.mxu0 0.0
    %v1982 = vand.u32 %v29, 4294901760
    %v1983 = vsub.f32 %v29, %v1982
    %v1984 = vand.u32 %v1983, 4294901760
    %1985 = vmatpush1.msra.mxu0 %v1984
    %1986 = vmatprep.subr.mxu0 0.0
    %v1987 = vand.u32 %v28, 4294901760
    %v1988 = vsub.f32 %v28, %v1987
    %v1989 = vand.u32 %v1988, 4294901760
    %1990 = vmatpush1.msra.mxu0 %v1989
    %1991 = vmatprep.subr.mxu0 0.0
    %v1992 = vand.u32 %v27, 4294901760
    %v1993 = vsub.f32 %v27, %v1992
    %v1994 = vand.u32 %v1993, 4294901760
    %1995 = vmatpush1.msra.mxu0 %v1994
    %1996 = vmatprep.subr.mxu0 0.0
    %v1997 = vand.u32 %v26, 4294901760
    %v1998 = vsub.f32 %v26, %v1997
    %v1999 = vand.u32 %v1998, 4294901760
    %2000 = vmatpush1.msra.mxu0 %v1999
    %2001 = vmatprep.subr.mxu0 0.0
    %v2002 = vand.u32 %v25, 4294901760
    %v2003 = vsub.f32 %v25, %v2002
    %v2004 = vand.u32 %v2003, 4294901760
    %2005 = vmatpush1.msra.mxu0 %v2004
    %2006 = vmatprep.subr.mxu0 0.0
    %v2007 = vand.u32 %v24, 4294901760
    %v2008 = vsub.f32 %v24, %v2007
    %v2009 = vand.u32 %v2008, 4294901760
    %2010 = vmatpush1.msra.mxu0 %v2009
    %2011 = vmatprep.subr.mxu0 0.0
    %v2012 = vand.u32 %v23, 4294901760
    %v2013 = vsub.f32 %v23, %v2012
    %v2014 = vand.u32 %v2013, 4294901760
    %2015 = vmatpush1.msra.mxu0 %v2014
    %2016 = vmatprep.subr.mxu0 0.0
    %v2017 = vand.u32 %v22, 4294901760
    %v2018 = vsub.f32 %v22, %v2017
    %v2019 = vand.u32 %v2018, 4294901760
    %2020 = vmatpush1.msra.mxu0 %v2019
    %2021 = vmatprep.subr.mxu0 0.0
    %2022 = vmatpush2.msra.mxu0 0.0
    %2023 = vmatprep.subr.mxu0 0.0
    %2024 = vmatpush2.msra.mxu0 0.0
    %2025 = vmatprep.subr.mxu0 0.0
    %2026 = vmatpush2.msra.mxu0 0.0
    %2027 = vmatprep.subr.mxu0 0.0
    %2028 = vmatpush2.msra.mxu0 0.0
    %2029 = vmatprep.subr.mxu0 0.0
    %2030 = vmatpush2.msra.mxu0 0.0
    %2031 = vmatprep.subr.mxu0 0.0
    %2032 = vmatpush2.msra.mxu0 0.0
    %2033 = vmatprep.subr.mxu0 0.0
    %2034 = vmatpush2.msra.mxu0 0.0
    %2035 = vmatprep.subr.mxu0 0.0
    %2036 = vmatpush2.msra.mxu0 0.0
    %2037 = vmatprep.subr.mxu0 0.0
    %2038 = vmatpush2.msra.mxu0 0.0
    %2039 = vmatprep.subr.mxu0 0.0
    %2040 = vmatpush2.msra.mxu0 0.0
    %2041 = vmatprep.subr.mxu0 0.0
    %2042 = vmatpush2.msra.mxu0 0.0
    %2043 = vmatprep.subr.mxu0 0.0
    %2044 = vmatpush2.msra.mxu0 0.0
    %2045 = vmatprep.subr.mxu0 0.0
    %2046 = vmatpush2.msra.mxu0 0.0
    %2047 = vmatprep.subr.mxu0 0.0
    %2048 = vmatpush2.msra.mxu0 0.0
    %2049 = vmatprep.subr.mxu0 0.0
    %2050 = vmatpush2.msra.mxu0 0.0
    %2051 = vmatprep.subr.mxu0 0.0
    %2052 = vmatpush2.msra.mxu0 0.0
    %2053 = vmatprep.mubr.f32.mxu0 0.0
    %v2054 = vand.u32 %v1409, 4294901760
    %2055 = vmatmul.mubr.f32.gmra.mxu0 %v2054
    %v2056 = vpop.f32.mrf.mxu0
    %v2057 = vadd.f32 %v1914, %v2056
    %v2058 = vpop.f32.mrf.mxu0
    %2059 = vmatprep.mubr.f32.mxu0 0.0
    %v2060 = vand.u32 %v1410, 4294901760
    %2061 = vmatmul.mubr.f32.gmra.mxu0 %v2060
    %v2062 = vpop.f32.mrf.mxu0
    %v2063 = vadd.f32 %v1922, %v2062
    %v2064 = vpop.f32.mrf.mxu0
    %2065 = vmatprep.mubr.f32.mxu0 0.0
    %v2066 = vand.u32 %v1411, 4294901760
    %2067 = vmatmul.mubr.f32.gmra.mxu0 %v2066
    %v2068 = vpop.f32.mrf.mxu0
    %v2069 = vadd.f32 %v1930, %v2068
    %v2070 = vpop.f32.mrf.mxu0
    %2071 = vmatprep.mubr.f32.mxu0 0.0
    %v2072 = vand.u32 %v1412, 4294901760
    %2073 = vmatmul.mubr.f32.gmra.mxu0 %v2072
    %v2074 = vpop.f32.mrf.mxu0
    %v2075 = vadd.f32 %v1938, %v2074
    %v2076 = vpop.f32.mrf.mxu0
    %2077 = vdwg.mxu0
    %2078 = vmatprep.subr.mxu0 0.0
    %v2079 = vand.u32 %v37, 4294901760
    %2080 = vmatpush1.msra.mxu0 %v2079
    %2081 = vmatprep.subr.mxu0 0.0
    %v2082 = vand.u32 %v36, 4294901760
    %2083 = vmatpush1.msra.mxu0 %v2082
    %2084 = vmatprep.subr.mxu0 0.0
    %v2085 = vand.u32 %v35, 4294901760
    %2086 = vmatpush1.msra.mxu0 %v2085
    %2087 = vmatprep.subr.mxu0 0.0
    %v2088 = vand.u32 %v34, 4294901760
    %2089 = vmatpush1.msra.mxu0 %v2088
    %2090 = vmatprep.subr.mxu0 0.0
    %v2091 = vand.u32 %v33, 4294901760
    %2092 = vmatpush1.msra.mxu0 %v2091
    %2093 = vmatprep.subr.mxu0 0.0
    %v2094 = vand.u32 %v32, 4294901760
    %2095 = vmatpush1.msra.mxu0 %v2094
    %2096 = vmatprep.subr.mxu0 0.0
    %v2097 = vand.u32 %v31, 4294901760
    %2098 = vmatpush1.msra.mxu0 %v2097
    %2099 = vmatprep.subr.mxu0 0.0
    %v2100 = vand.u32 %v30, 4294901760
    %2101 = vmatpush1.msra.mxu0 %v2100
    %2102 = vmatprep.subr.mxu0 0.0
    %v2103 = vand.u32 %v29, 4294901760
    %2104 = vmatpush1.msra.mxu0 %v2103
    %2105 = vmatprep.subr.mxu0 0.0
    %v2106 = vand.u32 %v28, 4294901760
    %2107 = vmatpush1.msra.mxu0 %v2106
    %2108 = vmatprep.subr.mxu0 0.0
    %v2109 = vand.u32 %v27, 4294901760
    %2110 = vmatpush1.msra.mxu0 %v2109
    %2111 = vmatprep.subr.mxu0 0.0
    %v2112 = vand.u32 %v26, 4294901760
    %2113 = vmatpush1.msra.mxu0 %v2112
    %2114 = vmatprep.subr.mxu0 0.0
    %v2115 = vand.u32 %v25, 4294901760
    %2116 = vmatpush1.msra.mxu0 %v2115
    %2117 = vmatprep.subr.mxu0 0.0
    %v2118 = vand.u32 %v24, 4294901760
    %2119 = vmatpush1.msra.mxu0 %v2118
    %2120 = vmatprep.subr.mxu0 0.0
    %v2121 = vand.u32 %v23, 4294901760
    %2122 = vmatpush1.msra.mxu0 %v2121
    %2123 = vmatprep.subr.mxu0 0.0
    %v2124 = vand.u32 %v22, 4294901760
    %2125 = vmatpush1.msra.mxu0 %v2124
    %2126 = vmatprep.subr.mxu0 0.0
    %2127 = vmatpush2.msra.mxu0 0.0
    %2128 = vmatprep.subr.mxu0 0.0
    %2129 = vmatpush2.msra.mxu0 0.0
    %2130 = vmatprep.subr.mxu0 0.0
    %2131 = vmatpush2.msra.mxu0 0.0
    %2132 = vmatprep.subr.mxu0 0.0
    %2133 = vmatpush2.msra.mxu0 0.0
    %2134 = vmatprep.subr.mxu0 0.0
    %2135 = vmatpush2.msra.mxu0 0.0
    %2136 = vmatprep.subr.mxu0 0.0
    %2137 = vmatpush2.msra.mxu0 0.0
    %2138 = vmatprep.subr.mxu0 0.0
    %2139 = vmatpush2.msra.mxu0 0.0
    %2140 = vmatprep.subr.mxu0 0.0
    %2141 = vmatpush2.msra.mxu0 0.0
    %2142 = vmatprep.subr.mxu0 0.0
    %2143 = vmatpush2.msra.mxu0 0.0
    %2144 = vmatprep.subr.mxu0 0.0
    %2145 = vmatpush2.msra.mxu0 0.0
    %2146 = vmatprep.subr.mxu0 0.0
    %2147 = vmatpush2.msra.mxu0 0.0
    %2148 = vmatprep.subr.mxu0 0.0
    %2149 = vmatpush2.msra.mxu0 0.0
    %2150 = vmatprep.subr.mxu0 0.0
    %2151 = vmatpush2.msra.mxu0 0.0
    %2152 = vmatprep.subr.mxu0 0.0
    %2153 = vmatpush2.msra.mxu0 0.0
    %2154 = vmatprep.subr.mxu0 0.0
    %2155 = vmatpush2.msra.mxu0 0.0
    %2156 = vmatprep.subr.mxu0 0.0
    %2157 = vmatpush2.msra.mxu0 0.0
    %2158 = vmatprep.mubr.f32.mxu0 0.0
    %v2159 = vand.u32 %v1409, 4294901760
    %2160 = vmatmul.mubr.f32.gmra.mxu0 %v2159
    %v2161 = vpop.f32.mrf.mxu0
    %v2162 = vadd.f32 %v2057, %v2161
    %v2163 = vpop.f32.mrf.mxu0
    %2164 = vmatprep.mubr.f32.mxu0 0.0
    %v2165 = vand.u32 %v1410, 4294901760
    %2166 = vmatmul.mubr.f32.gmra.mxu0 %v2165
    %v2167 = vpop.f32.mrf.mxu0
    %v2168 = vadd.f32 %v2063, %v2167
    %v2169 = vpop.f32.mrf.mxu0
    %2170 = vmatprep.mubr.f32.mxu0 0.0
    %v2171 = vand.u32 %v1411, 4294901760
    %2172 = vmatmul.mubr.f32.gmra.mxu0 %v2171
    %v2173 = vpop.f32.mrf.mxu0
    %v2174 = vadd.f32 %v2069, %v2173
    %v2175 = vpop.f32.mrf.mxu0
    %2176 = vmatprep.mubr.f32.mxu0 0.0
    %v2177 = vand.u32 %v1412, 4294901760
    %2178 = vmatmul.mubr.f32.gmra.mxu0 %v2177
    %v2179 = vpop.f32.mrf.mxu0
    %v2180 = vadd.f32 %v2075, %v2179
    %v2181 = vpop.f32.mrf.mxu0
    %2182 = vdwg.mxu0
    %v2183 = vmul.f32 %v2162, 0.03125
    %v2184 = vmul.f32 %v2168, 0.03125
    %v2185 = vmul.f32 %v2174, 0.03125
    %v2186 = vmul.f32 %v2180, 0.03125
    %v2187 = vadd.f32 %v2183, 1e-05
    %v2188 = vadd.f32 %v2184, 1e-05
    %v2189 = vadd.f32 %v2185, 1e-05
    %v2190 = vadd.f32 %v2186, 1e-05
    %v2191 = vrsqrt.pop %v2187
    %v2192 = vrsqrt.pop %v2188
    %v2193 = vrsqrt.pop %v2189
    %v2194 = vrsqrt.pop %v2190
    %v2195 = vld [vmem:[%s3] sm:$0xf]
    %v2197 = vsel %vm813, %v2191, 0
    %v2200 = vsel %vm813, %v2192, 0
    %v2203 = vsel %vm813, %v2193, 0
    %v2206 = vsel %vm813, %v2194, 0
    %v2209 = vsel %vm826, %v2195, 0
    %2211 = vmatprep.subr.mxu0 0.0
    %2212 = vmatpush1.msra.mxu0 0.0
    %2213 = vmatprep.subr.mxu0 0.0
    %2214 = vmatpush1.msra.mxu0 0.0
    %2215 = vmatprep.subr.mxu0 0.0
    %2216 = vmatpush1.msra.mxu0 0.0
    %2217 = vmatprep.subr.mxu0 0.0
    %2218 = vmatpush1.msra.mxu0 0.0
    %2219 = vmatprep.subr.mxu0 0.0
    %2220 = vmatpush1.msra.mxu0 0.0
    %2221 = vmatprep.subr.mxu0 0.0
    %2222 = vmatpush1.msra.mxu0 0.0
    %2223 = vmatprep.subr.mxu0 0.0
    %2224 = vmatpush1.msra.mxu0 0.0
    %2225 = vmatprep.subr.mxu0 0.0
    %2226 = vmatpush1.msra.mxu0 0.0
    %2227 = vmatprep.subr.mxu0 0.0
    %2228 = vmatpush1.msra.mxu0 0.0
    %2229 = vmatprep.subr.mxu0 0.0
    %2230 = vmatpush1.msra.mxu0 0.0
    %2231 = vmatprep.subr.mxu0 0.0
    %2232 = vmatpush1.msra.mxu0 0.0
    %2233 = vmatprep.subr.mxu0 0.0
    %2234 = vmatpush1.msra.mxu0 0.0
    %2235 = vmatprep.subr.mxu0 0.0
    %2236 = vmatpush1.msra.mxu0 0.0
    %2237 = vmatprep.subr.mxu0 0.0
    %2238 = vmatpush1.msra.mxu0 0.0
    %2239 = vmatprep.subr.mxu0 0.0
    %2240 = vmatpush1.msra.mxu0 0.0
    %2241 = vmatprep.subr.mxu0 0.0
    %v2242 = vand.u32 %v2209, 4294901760
    %2243 = vmatpush1.msra.mxu0 %v2242
    %2244 = vmatprep.subr.mxu0 0.0
    %2245 = vmatpush2.msra.mxu0 0.0
    %2246 = vmatprep.subr.mxu0 0.0
    %2247 = vmatpush2.msra.mxu0 0.0
    %2248 = vmatprep.subr.mxu0 0.0
    %2249 = vmatpush2.msra.mxu0 0.0
    %2250 = vmatprep.subr.mxu0 0.0
    %2251 = vmatpush2.msra.mxu0 0.0
    %2252 = vmatprep.subr.mxu0 0.0
    %2253 = vmatpush2.msra.mxu0 0.0
    %2254 = vmatprep.subr.mxu0 0.0
    %2255 = vmatpush2.msra.mxu0 0.0
    %2256 = vmatprep.subr.mxu0 0.0
    %2257 = vmatpush2.msra.mxu0 0.0
    %2258 = vmatprep.subr.mxu0 0.0
    %2259 = vmatpush2.msra.mxu0 0.0
    %2260 = vmatprep.subr.mxu0 0.0
    %2261 = vmatpush2.msra.mxu0 0.0
    %2262 = vmatprep.subr.mxu0 0.0
    %2263 = vmatpush2.msra.mxu0 0.0
    %2264 = vmatprep.subr.mxu0 0.0
    %2265 = vmatpush2.msra.mxu0 0.0
    %2266 = vmatprep.subr.mxu0 0.0
    %2267 = vmatpush2.msra.mxu0 0.0
    %2268 = vmatprep.subr.mxu0 0.0
    %2269 = vmatpush2.msra.mxu0 0.0
    %2270 = vmatprep.subr.mxu0 0.0
    %2271 = vmatpush2.msra.mxu0 0.0
    %2272 = vmatprep.subr.mxu0 0.0
    %2273 = vmatpush2.msra.mxu0 0.0
    %2274 = vmatprep.subr.mxu0 0.0
    %2275 = vmatpush2.msra.mxu0 0.0
    %2276 = vmatprep.mubr.f32.mxu0 0.0
    %v2277 = vand.u32 %v2197, 4294901760
    %v2278 = vsub.f32 %v2197, %v2277
    %v2279 = vand.u32 %v2278, 4294901760
    %v2280 = vsub.f32 %v2278, %v2279
    %v2281 = vand.u32 %v2280, 4294901760
    %2282 = vmatmul.mubr.f32.gmra.mxu0 %v2281
    %v2283 = vpop.f32.mrf.mxu0
    %v2284 = vadd.f32 0.0, %v2283
    %v2285 = vpop.f32.mrf.mxu0
    %2286 = vmatprep.mubr.f32.mxu0 0.0
    %v2287 = vand.u32 %v2200, 4294901760
    %v2288 = vsub.f32 %v2200, %v2287
    %v2289 = vand.u32 %v2288, 4294901760
    %v2290 = vsub.f32 %v2288, %v2289
    %v2291 = vand.u32 %v2290, 4294901760
    %2292 = vmatmul.mubr.f32.gmra.mxu0 %v2291
    %v2293 = vpop.f32.mrf.mxu0
    %v2294 = vadd.f32 0.0, %v2293
    %v2295 = vpop.f32.mrf.mxu0
    %2296 = vmatprep.mubr.f32.mxu0 0.0
    %v2297 = vand.u32 %v2203, 4294901760
    %v2298 = vsub.f32 %v2203, %v2297
    %v2299 = vand.u32 %v2298, 4294901760
    %v2300 = vsub.f32 %v2298, %v2299
    %v2301 = vand.u32 %v2300, 4294901760
    %2302 = vmatmul.mubr.f32.gmra.mxu0 %v2301
    %v2303 = vpop.f32.mrf.mxu0
    %v2304 = vadd.f32 0.0, %v2303
    %v2305 = vpop.f32.mrf.mxu0
    %2306 = vmatprep.mubr.f32.mxu0 0.0
    %v2307 = vand.u32 %v2206, 4294901760
    %v2308 = vsub.f32 %v2206, %v2307
    %v2309 = vand.u32 %v2308, 4294901760
    %v2310 = vsub.f32 %v2308, %v2309
    %v2311 = vand.u32 %v2310, 4294901760
    %2312 = vmatmul.mubr.f32.gmra.mxu0 %v2311
    %v2313 = vpop.f32.mrf.mxu0
    %v2314 = vadd.f32 0.0, %v2313
    %v2315 = vpop.f32.mrf.mxu0
    %2316 = vdwg.mxu0
    %2317 = vmatprep.subr.mxu0 0.0
    %2318 = vmatpush1.msra.mxu0 0.0
    %2319 = vmatprep.subr.mxu0 0.0
    %2320 = vmatpush1.msra.mxu0 0.0
    %2321 = vmatprep.subr.mxu0 0.0
    %2322 = vmatpush1.msra.mxu0 0.0
    %2323 = vmatprep.subr.mxu0 0.0
    %2324 = vmatpush1.msra.mxu0 0.0
    %2325 = vmatprep.subr.mxu0 0.0
    %2326 = vmatpush1.msra.mxu0 0.0
    %2327 = vmatprep.subr.mxu0 0.0
    %2328 = vmatpush1.msra.mxu0 0.0
    %2329 = vmatprep.subr.mxu0 0.0
    %2330 = vmatpush1.msra.mxu0 0.0
    %2331 = vmatprep.subr.mxu0 0.0
    %2332 = vmatpush1.msra.mxu0 0.0
    %2333 = vmatprep.subr.mxu0 0.0
    %2334 = vmatpush1.msra.mxu0 0.0
    %2335 = vmatprep.subr.mxu0 0.0
    %2336 = vmatpush1.msra.mxu0 0.0
    %2337 = vmatprep.subr.mxu0 0.0
    %2338 = vmatpush1.msra.mxu0 0.0
    %2339 = vmatprep.subr.mxu0 0.0
    %2340 = vmatpush1.msra.mxu0 0.0
    %2341 = vmatprep.subr.mxu0 0.0
    %2342 = vmatpush1.msra.mxu0 0.0
    %2343 = vmatprep.subr.mxu0 0.0
    %2344 = vmatpush1.msra.mxu0 0.0
    %2345 = vmatprep.subr.mxu0 0.0
    %2346 = vmatpush1.msra.mxu0 0.0
    %2347 = vmatprep.subr.mxu0 0.0
    %v2348 = vand.u32 %v2209, 4294901760
    %v2349 = vsub.f32 %v2209, %v2348
    %v2350 = vand.u32 %v2349, 4294901760
    %v2351 = vsub.f32 %v2349, %v2350
    %v2352 = vand.u32 %v2351, 4294901760
    %2353 = vmatpush1.msra.mxu0 %v2352
    %2354 = vmatprep.subr.mxu0 0.0
    %2355 = vmatpush2.msra.mxu0 0.0
    %2356 = vmatprep.subr.mxu0 0.0
    %2357 = vmatpush2.msra.mxu0 0.0
    %2358 = vmatprep.subr.mxu0 0.0
    %2359 = vmatpush2.msra.mxu0 0.0
    %2360 = vmatprep.subr.mxu0 0.0
    %2361 = vmatpush2.msra.mxu0 0.0
    %2362 = vmatprep.subr.mxu0 0.0
    %2363 = vmatpush2.msra.mxu0 0.0
    %2364 = vmatprep.subr.mxu0 0.0
    %2365 = vmatpush2.msra.mxu0 0.0
    %2366 = vmatprep.subr.mxu0 0.0
    %2367 = vmatpush2.msra.mxu0 0.0
    %2368 = vmatprep.subr.mxu0 0.0
    %2369 = vmatpush2.msra.mxu0 0.0
    %2370 = vmatprep.subr.mxu0 0.0
    %2371 = vmatpush2.msra.mxu0 0.0
    %2372 = vmatprep.subr.mxu0 0.0
    %2373 = vmatpush2.msra.mxu0 0.0
    %2374 = vmatprep.subr.mxu0 0.0
    %2375 = vmatpush2.msra.mxu0 0.0
    %2376 = vmatprep.subr.mxu0 0.0
    %2377 = vmatpush2.msra.mxu0 0.0
    %2378 = vmatprep.subr.mxu0 0.0
    %2379 = vmatpush2.msra.mxu0 0.0
    %2380 = vmatprep.subr.mxu0 0.0
    %2381 = vmatpush2.msra.mxu0 0.0
    %2382 = vmatprep.subr.mxu0 0.0
    %2383 = vmatpush2.msra.mxu0 0.0
    %2384 = vmatprep.subr.mxu0 0.0
    %2385 = vmatpush2.msra.mxu0 0.0
    %2386 = vmatprep.mubr.f32.mxu0 0.0
    %v2387 = vand.u32 %v2197, 4294901760
    %2388 = vmatmul.mubr.f32.gmra.mxu0 %v2387
    %v2389 = vpop.f32.mrf.mxu0
    %v2390 = vadd.f32 %v2284, %v2389
    %v2391 = vpop.f32.mrf.mxu0
    %2392 = vmatprep.mubr.f32.mxu0 0.0
    %v2393 = vand.u32 %v2200, 4294901760
    %2394 = vmatmul.mubr.f32.gmra.mxu0 %v2393
    %v2395 = vpop.f32.mrf.mxu0
    %v2396 = vadd.f32 %v2294, %v2395
    %v2397 = vpop.f32.mrf.mxu0
    %2398 = vmatprep.mubr.f32.mxu0 0.0
    %v2399 = vand.u32 %v2203, 4294901760
    %2400 = vmatmul.mubr.f32.gmra.mxu0 %v2399
    %v2401 = vpop.f32.mrf.mxu0
    %v2402 = vadd.f32 %v2304, %v2401
    %v2403 = vpop.f32.mrf.mxu0
    %2404 = vmatprep.mubr.f32.mxu0 0.0
    %v2405 = vand.u32 %v2206, 4294901760
    %2406 = vmatmul.mubr.f32.gmra.mxu0 %v2405
    %v2407 = vpop.f32.mrf.mxu0
    %v2408 = vadd.f32 %v2314, %v2407
    %v2409 = vpop.f32.mrf.mxu0
    %2410 = vdwg.mxu0
    %2411 = vmatprep.subr.mxu0 0.0
    %2412 = vmatpush1.msra.mxu0 0.0
    %2413 = vmatprep.subr.mxu0 0.0
    %2414 = vmatpush1.msra.mxu0 0.0
    %2415 = vmatprep.subr.mxu0 0.0
    %2416 = vmatpush1.msra.mxu0 0.0
    %2417 = vmatprep.subr.mxu0 0.0
    %2418 = vmatpush1.msra.mxu0 0.0
    %2419 = vmatprep.subr.mxu0 0.0
    %2420 = vmatpush1.msra.mxu0 0.0
    %2421 = vmatprep.subr.mxu0 0.0
    %2422 = vmatpush1.msra.mxu0 0.0
    %2423 = vmatprep.subr.mxu0 0.0
    %2424 = vmatpush1.msra.mxu0 0.0
    %2425 = vmatprep.subr.mxu0 0.0
    %2426 = vmatpush1.msra.mxu0 0.0
    %2427 = vmatprep.subr.mxu0 0.0
    %2428 = vmatpush1.msra.mxu0 0.0
    %2429 = vmatprep.subr.mxu0 0.0
    %2430 = vmatpush1.msra.mxu0 0.0
    %2431 = vmatprep.subr.mxu0 0.0
    %2432 = vmatpush1.msra.mxu0 0.0
    %2433 = vmatprep.subr.mxu0 0.0
    %2434 = vmatpush1.msra.mxu0 0.0
    %2435 = vmatprep.subr.mxu0 0.0
    %2436 = vmatpush1.msra.mxu0 0.0
    %2437 = vmatprep.subr.mxu0 0.0
    %2438 = vmatpush1.msra.mxu0 0.0
    %2439 = vmatprep.subr.mxu0 0.0
    %2440 = vmatpush1.msra.mxu0 0.0
    %2441 = vmatprep.subr.mxu0 0.0
    %v2442 = vand.u32 %v2209, 4294901760
    %v2443 = vsub.f32 %v2209, %v2442
    %2444 = vmatpush1.msra.mxu0 %v2443
    %2445 = vmatprep.subr.mxu0 0.0
    %2446 = vmatpush2.msra.mxu0 0.0
    %2447 = vmatprep.subr.mxu0 0.0
    %2448 = vmatpush2.msra.mxu0 0.0
    %2449 = vmatprep.subr.mxu0 0.0
    %2450 = vmatpush2.msra.mxu0 0.0
    %2451 = vmatprep.subr.mxu0 0.0
    %2452 = vmatpush2.msra.mxu0 0.0
    %2453 = vmatprep.subr.mxu0 0.0
    %2454 = vmatpush2.msra.mxu0 0.0
    %2455 = vmatprep.subr.mxu0 0.0
    %2456 = vmatpush2.msra.mxu0 0.0
    %2457 = vmatprep.subr.mxu0 0.0
    %2458 = vmatpush2.msra.mxu0 0.0
    %2459 = vmatprep.subr.mxu0 0.0
    %2460 = vmatpush2.msra.mxu0 0.0
    %2461 = vmatprep.subr.mxu0 0.0
    %2462 = vmatpush2.msra.mxu0 0.0
    %2463 = vmatprep.subr.mxu0 0.0
    %2464 = vmatpush2.msra.mxu0 0.0
    %2465 = vmatprep.subr.mxu0 0.0
    %2466 = vmatpush2.msra.mxu0 0.0
    %2467 = vmatprep.subr.mxu0 0.0
    %2468 = vmatpush2.msra.mxu0 0.0
    %2469 = vmatprep.subr.mxu0 0.0
    %2470 = vmatpush2.msra.mxu0 0.0
    %2471 = vmatprep.subr.mxu0 0.0
    %2472 = vmatpush2.msra.mxu0 0.0
    %2473 = vmatprep.subr.mxu0 0.0
    %2474 = vmatpush2.msra.mxu0 0.0
    %2475 = vmatprep.subr.mxu0 0.0
    %2476 = vmatpush2.msra.mxu0 0.0
    %2477 = vmatprep.mubr.f32.mxu0 0.0
    %v2478 = vand.u32 %v2197, 4294901760
    %v2479 = vsub.f32 %v2197, %v2478
    %2480 = vmatmul.mubr.f32.gmra.mxu0 %v2479
    %v2481 = vpop.f32.mrf.mxu0
    %v2482 = vadd.f32 %v2390, %v2481
    %v2483 = vpop.f32.mrf.mxu0
    %2484 = vmatprep.mubr.f32.mxu0 0.0
    %v2485 = vand.u32 %v2200, 4294901760
    %v2486 = vsub.f32 %v2200, %v2485
    %2487 = vmatmul.mubr.f32.gmra.mxu0 %v2486
    %v2488 = vpop.f32.mrf.mxu0
    %v2489 = vadd.f32 %v2396, %v2488
    %v2490 = vpop.f32.mrf.mxu0
    %2491 = vmatprep.mubr.f32.mxu0 0.0
    %v2492 = vand.u32 %v2203, 4294901760
    %v2493 = vsub.f32 %v2203, %v2492
    %2494 = vmatmul.mubr.f32.gmra.mxu0 %v2493
    %v2495 = vpop.f32.mrf.mxu0
    %v2496 = vadd.f32 %v2402, %v2495
    %v2497 = vpop.f32.mrf.mxu0
    %2498 = vmatprep.mubr.f32.mxu0 0.0
    %v2499 = vand.u32 %v2206, 4294901760
    %v2500 = vsub.f32 %v2206, %v2499
    %2501 = vmatmul.mubr.f32.gmra.mxu0 %v2500
    %v2502 = vpop.f32.mrf.mxu0
    %v2503 = vadd.f32 %v2408, %v2502
    %v2504 = vpop.f32.mrf.mxu0
    %2505 = vdwg.mxu0
    %2506 = vmatprep.subr.mxu0 0.0
    %2507 = vmatpush1.msra.mxu0 0.0
    %2508 = vmatprep.subr.mxu0 0.0
    %2509 = vmatpush1.msra.mxu0 0.0
    %2510 = vmatprep.subr.mxu0 0.0
    %2511 = vmatpush1.msra.mxu0 0.0
    %2512 = vmatprep.subr.mxu0 0.0
    %2513 = vmatpush1.msra.mxu0 0.0
    %2514 = vmatprep.subr.mxu0 0.0
    %2515 = vmatpush1.msra.mxu0 0.0
    %2516 = vmatprep.subr.mxu0 0.0
    %2517 = vmatpush1.msra.mxu0 0.0
    %2518 = vmatprep.subr.mxu0 0.0
    %2519 = vmatpush1.msra.mxu0 0.0
    %2520 = vmatprep.subr.mxu0 0.0
    %2521 = vmatpush1.msra.mxu0 0.0
    %2522 = vmatprep.subr.mxu0 0.0
    %2523 = vmatpush1.msra.mxu0 0.0
    %2524 = vmatprep.subr.mxu0 0.0
    %2525 = vmatpush1.msra.mxu0 0.0
    %2526 = vmatprep.subr.mxu0 0.0
    %2527 = vmatpush1.msra.mxu0 0.0
    %2528 = vmatprep.subr.mxu0 0.0
    %2529 = vmatpush1.msra.mxu0 0.0
    %2530 = vmatprep.subr.mxu0 0.0
    %2531 = vmatpush1.msra.mxu0 0.0
    %2532 = vmatprep.subr.mxu0 0.0
    %2533 = vmatpush1.msra.mxu0 0.0
    %2534 = vmatprep.subr.mxu0 0.0
    %2535 = vmatpush1.msra.mxu0 0.0
    %2536 = vmatprep.subr.mxu0 0.0
    %v2537 = vand.u32 %v2209, 4294901760
    %2538 = vmatpush1.msra.mxu0 %v2537
    %2539 = vmatprep.subr.mxu0 0.0
    %2540 = vmatpush2.msra.mxu0 0.0
    %2541 = vmatprep.subr.mxu0 0.0
    %2542 = vmatpush2.msra.mxu0 0.0
    %2543 = vmatprep.subr.mxu0 0.0
    %2544 = vmatpush2.msra.mxu0 0.0
    %2545 = vmatprep.subr.mxu0 0.0
    %2546 = vmatpush2.msra.mxu0 0.0
    %2547 = vmatprep.subr.mxu0 0.0
    %2548 = vmatpush2.msra.mxu0 0.0
    %2549 = vmatprep.subr.mxu0 0.0
    %2550 = vmatpush2.msra.mxu0 0.0
    %2551 = vmatprep.subr.mxu0 0.0
    %2552 = vmatpush2.msra.mxu0 0.0
    %2553 = vmatprep.subr.mxu0 0.0
    %2554 = vmatpush2.msra.mxu0 0.0
    %2555 = vmatprep.subr.mxu0 0.0
    %2556 = vmatpush2.msra.mxu0 0.0
    %2557 = vmatprep.subr.mxu0 0.0
    %2558 = vmatpush2.msra.mxu0 0.0
    %2559 = vmatprep.subr.mxu0 0.0
    %2560 = vmatpush2.msra.mxu0 0.0
    %2561 = vmatprep.subr.mxu0 0.0
    %2562 = vmatpush2.msra.mxu0 0.0
    %2563 = vmatprep.subr.mxu0 0.0
    %2564 = vmatpush2.msra.mxu0 0.0
    %2565 = vmatprep.subr.mxu0 0.0
    %2566 = vmatpush2.msra.mxu0 0.0
    %2567 = vmatprep.subr.mxu0 0.0
    %2568 = vmatpush2.msra.mxu0 0.0
    %2569 = vmatprep.subr.mxu0 0.0
    %2570 = vmatpush2.msra.mxu0 0.0
    %2571 = vmatprep.mubr.f32.mxu0 0.0
    %v2572 = vand.u32 %v2197, 4294901760
    %v2573 = vsub.f32 %v2197, %v2572
    %v2574 = vand.u32 %v2573, 4294901760
    %2575 = vmatmul.mubr.f32.gmra.mxu0 %v2574
    %v2576 = vpop.f32.mrf.mxu0
    %v2577 = vadd.f32 %v2482, %v2576
    %v2578 = vpop.f32.mrf.mxu0
    %2579 = vmatprep.mubr.f32.mxu0 0.0
    %v2580 = vand.u32 %v2200, 4294901760
    %v2581 = vsub.f32 %v2200, %v2580
    %v2582 = vand.u32 %v2581, 4294901760
    %2583 = vmatmul.mubr.f32.gmra.mxu0 %v2582
    %v2584 = vpop.f32.mrf.mxu0
    %v2585 = vadd.f32 %v2489, %v2584
    %v2586 = vpop.f32.mrf.mxu0
    %2587 = vmatprep.mubr.f32.mxu0 0.0
    %v2588 = vand.u32 %v2203, 4294901760
    %v2589 = vsub.f32 %v2203, %v2588
    %v2590 = vand.u32 %v2589, 4294901760
    %2591 = vmatmul.mubr.f32.gmra.mxu0 %v2590
    %v2592 = vpop.f32.mrf.mxu0
    %v2593 = vadd.f32 %v2496, %v2592
    %v2594 = vpop.f32.mrf.mxu0
    %2595 = vmatprep.mubr.f32.mxu0 0.0
    %v2596 = vand.u32 %v2206, 4294901760
    %v2597 = vsub.f32 %v2206, %v2596
    %v2598 = vand.u32 %v2597, 4294901760
    %2599 = vmatmul.mubr.f32.gmra.mxu0 %v2598
    %v2600 = vpop.f32.mrf.mxu0
    %v2601 = vadd.f32 %v2503, %v2600
    %v2602 = vpop.f32.mrf.mxu0
    %2603 = vdwg.mxu0
    %2604 = vmatprep.subr.mxu0 0.0
    %2605 = vmatpush1.msra.mxu0 0.0
    %2606 = vmatprep.subr.mxu0 0.0
    %2607 = vmatpush1.msra.mxu0 0.0
    %2608 = vmatprep.subr.mxu0 0.0
    %2609 = vmatpush1.msra.mxu0 0.0
    %2610 = vmatprep.subr.mxu0 0.0
    %2611 = vmatpush1.msra.mxu0 0.0
    %2612 = vmatprep.subr.mxu0 0.0
    %2613 = vmatpush1.msra.mxu0 0.0
    %2614 = vmatprep.subr.mxu0 0.0
    %2615 = vmatpush1.msra.mxu0 0.0
    %2616 = vmatprep.subr.mxu0 0.0
    %2617 = vmatpush1.msra.mxu0 0.0
    %2618 = vmatprep.subr.mxu0 0.0
    %2619 = vmatpush1.msra.mxu0 0.0
    %2620 = vmatprep.subr.mxu0 0.0
    %2621 = vmatpush1.msra.mxu0 0.0
    %2622 = vmatprep.subr.mxu0 0.0
    %2623 = vmatpush1.msra.mxu0 0.0
    %2624 = vmatprep.subr.mxu0 0.0
    %2625 = vmatpush1.msra.mxu0 0.0
    %2626 = vmatprep.subr.mxu0 0.0
    %2627 = vmatpush1.msra.mxu0 0.0
    %2628 = vmatprep.subr.mxu0 0.0
    %2629 = vmatpush1.msra.mxu0 0.0
    %2630 = vmatprep.subr.mxu0 0.0
    %2631 = vmatpush1.msra.mxu0 0.0
    %2632 = vmatprep.subr.mxu0 0.0
    %2633 = vmatpush1.msra.mxu0 0.0
    %2634 = vmatprep.subr.mxu0 0.0
    %v2635 = vand.u32 %v2209, 4294901760
    %v2636 = vsub.f32 %v2209, %v2635
    %v2637 = vand.u32 %v2636, 4294901760
    %2638 = vmatpush1.msra.mxu0 %v2637
    %2639 = vmatprep.subr.mxu0 0.0
    %2640 = vmatpush2.msra.mxu0 0.0
    %2641 = vmatprep.subr.mxu0 0.0
    %2642 = vmatpush2.msra.mxu0 0.0
    %2643 = vmatprep.subr.mxu0 0.0
    %2644 = vmatpush2.msra.mxu0 0.0
    %2645 = vmatprep.subr.mxu0 0.0
    %2646 = vmatpush2.msra.mxu0 0.0
    %2647 = vmatprep.subr.mxu0 0.0
    %2648 = vmatpush2.msra.mxu0 0.0
    %2649 = vmatprep.subr.mxu0 0.0
    %2650 = vmatpush2.msra.mxu0 0.0
    %2651 = vmatprep.subr.mxu0 0.0
    %2652 = vmatpush2.msra.mxu0 0.0
    %2653 = vmatprep.subr.mxu0 0.0
    %2654 = vmatpush2.msra.mxu0 0.0
    %2655 = vmatprep.subr.mxu0 0.0
    %2656 = vmatpush2.msra.mxu0 0.0
    %2657 = vmatprep.subr.mxu0 0.0
    %2658 = vmatpush2.msra.mxu0 0.0
    %2659 = vmatprep.subr.mxu0 0.0
    %2660 = vmatpush2.msra.mxu0 0.0
    %2661 = vmatprep.subr.mxu0 0.0
    %2662 = vmatpush2.msra.mxu0 0.0
    %2663 = vmatprep.subr.mxu0 0.0
    %2664 = vmatpush2.msra.mxu0 0.0
    %2665 = vmatprep.subr.mxu0 0.0
    %2666 = vmatpush2.msra.mxu0 0.0
    %2667 = vmatprep.subr.mxu0 0.0
    %2668 = vmatpush2.msra.mxu0 0.0
    %2669 = vmatprep.subr.mxu0 0.0
    %2670 = vmatpush2.msra.mxu0 0.0
    %2671 = vmatprep.mubr.f32.mxu0 0.0
    %v2672 = vand.u32 %v2197, 4294901760
    %2673 = vmatmul.mubr.f32.gmra.mxu0 %v2672
    %v2674 = vpop.f32.mrf.mxu0
    %v2675 = vadd.f32 %v2577, %v2674
    %v2676 = vpop.f32.mrf.mxu0
    %2677 = vmatprep.mubr.f32.mxu0 0.0
    %v2678 = vand.u32 %v2200, 4294901760
    %2679 = vmatmul.mubr.f32.gmra.mxu0 %v2678
    %v2680 = vpop.f32.mrf.mxu0
    %v2681 = vadd.f32 %v2585, %v2680
    %v2682 = vpop.f32.mrf.mxu0
    %2683 = vmatprep.mubr.f32.mxu0 0.0
    %v2684 = vand.u32 %v2203, 4294901760
    %2685 = vmatmul.mubr.f32.gmra.mxu0 %v2684
    %v2686 = vpop.f32.mrf.mxu0
    %v2687 = vadd.f32 %v2593, %v2686
    %v2688 = vpop.f32.mrf.mxu0
    %2689 = vmatprep.mubr.f32.mxu0 0.0
    %v2690 = vand.u32 %v2206, 4294901760
    %2691 = vmatmul.mubr.f32.gmra.mxu0 %v2690
    %v2692 = vpop.f32.mrf.mxu0
    %v2693 = vadd.f32 %v2601, %v2692
    %v2694 = vpop.f32.mrf.mxu0
    %2695 = vdwg.mxu0
    %2696 = vmatprep.subr.mxu0 0.0
    %2697 = vmatpush1.msra.mxu0 0.0
    %2698 = vmatprep.subr.mxu0 0.0
    %2699 = vmatpush1.msra.mxu0 0.0
    %2700 = vmatprep.subr.mxu0 0.0
    %2701 = vmatpush1.msra.mxu0 0.0
    %2702 = vmatprep.subr.mxu0 0.0
    %2703 = vmatpush1.msra.mxu0 0.0
    %2704 = vmatprep.subr.mxu0 0.0
    %2705 = vmatpush1.msra.mxu0 0.0
    %2706 = vmatprep.subr.mxu0 0.0
    %2707 = vmatpush1.msra.mxu0 0.0
    %2708 = vmatprep.subr.mxu0 0.0
    %2709 = vmatpush1.msra.mxu0 0.0
    %2710 = vmatprep.subr.mxu0 0.0
    %2711 = vmatpush1.msra.mxu0 0.0
    %2712 = vmatprep.subr.mxu0 0.0
    %2713 = vmatpush1.msra.mxu0 0.0
    %2714 = vmatprep.subr.mxu0 0.0
    %2715 = vmatpush1.msra.mxu0 0.0
    %2716 = vmatprep.subr.mxu0 0.0
    %2717 = vmatpush1.msra.mxu0 0.0
    %2718 = vmatprep.subr.mxu0 0.0
    %2719 = vmatpush1.msra.mxu0 0.0
    %2720 = vmatprep.subr.mxu0 0.0
    %2721 = vmatpush1.msra.mxu0 0.0
    %2722 = vmatprep.subr.mxu0 0.0
    %2723 = vmatpush1.msra.mxu0 0.0
    %2724 = vmatprep.subr.mxu0 0.0
    %2725 = vmatpush1.msra.mxu0 0.0
    %2726 = vmatprep.subr.mxu0 0.0
    %v2727 = vand.u32 %v2209, 4294901760
    %2728 = vmatpush1.msra.mxu0 %v2727
    %2729 = vmatprep.subr.mxu0 0.0
    %2730 = vmatpush2.msra.mxu0 0.0
    %2731 = vmatprep.subr.mxu0 0.0
    %2732 = vmatpush2.msra.mxu0 0.0
    %2733 = vmatprep.subr.mxu0 0.0
    %2734 = vmatpush2.msra.mxu0 0.0
    %2735 = vmatprep.subr.mxu0 0.0
    %2736 = vmatpush2.msra.mxu0 0.0
    %2737 = vmatprep.subr.mxu0 0.0
    %2738 = vmatpush2.msra.mxu0 0.0
    %2739 = vmatprep.subr.mxu0 0.0
    %2740 = vmatpush2.msra.mxu0 0.0
    %2741 = vmatprep.subr.mxu0 0.0
    %2742 = vmatpush2.msra.mxu0 0.0
    %2743 = vmatprep.subr.mxu0 0.0
    %2744 = vmatpush2.msra.mxu0 0.0
    %2745 = vmatprep.subr.mxu0 0.0
    %2746 = vmatpush2.msra.mxu0 0.0
    %2747 = vmatprep.subr.mxu0 0.0
    %2748 = vmatpush2.msra.mxu0 0.0
    %2749 = vmatprep.subr.mxu0 0.0
    %2750 = vmatpush2.msra.mxu0 0.0
    %2751 = vmatprep.subr.mxu0 0.0
    %2752 = vmatpush2.msra.mxu0 0.0
    %2753 = vmatprep.subr.mxu0 0.0
    %2754 = vmatpush2.msra.mxu0 0.0
    %2755 = vmatprep.subr.mxu0 0.0
    %2756 = vmatpush2.msra.mxu0 0.0
    %2757 = vmatprep.subr.mxu0 0.0
    %2758 = vmatpush2.msra.mxu0 0.0
    %2759 = vmatprep.subr.mxu0 0.0
    %2760 = vmatpush2.msra.mxu0 0.0
    %2761 = vmatprep.mubr.f32.mxu0 0.0
    %v2762 = vand.u32 %v2197, 4294901760
    %2763 = vmatmul.mubr.f32.gmra.mxu0 %v2762
    %v2764 = vpop.f32.mrf.mxu0
    %v2765 = vadd.f32 %v2675, %v2764
    %v2766 = vpop.f32.mrf.mxu0
    %2767 = vmatprep.mubr.f32.mxu0 0.0
    %v2768 = vand.u32 %v2200, 4294901760
    %2769 = vmatmul.mubr.f32.gmra.mxu0 %v2768
    %v2770 = vpop.f32.mrf.mxu0
    %v2771 = vadd.f32 %v2681, %v2770
    %v2772 = vpop.f32.mrf.mxu0
    %2773 = vmatprep.mubr.f32.mxu0 0.0
    %v2774 = vand.u32 %v2203, 4294901760
    %2775 = vmatmul.mubr.f32.gmra.mxu0 %v2774
    %v2776 = vpop.f32.mrf.mxu0
    %v2777 = vadd.f32 %v2687, %v2776
    %v2778 = vpop.f32.mrf.mxu0
    %2779 = vmatprep.mubr.f32.mxu0 0.0
    %v2780 = vand.u32 %v2206, 4294901760
    %2781 = vmatmul.mubr.f32.gmra.mxu0 %v2780
    %v2782 = vpop.f32.mrf.mxu0
    %v2783 = vadd.f32 %v2693, %v2782
    %v2784 = vpop.f32.mrf.mxu0
    %2785 = vdwg.mxu0
    %v2786 = vmul.f32 %v18, %v2765
    %v2787 = vmul.f32 %v19, %v2771
    %v2788 = vmul.f32 %v20, %v2777
    %v2789 = vmul.f32 %v21, %v2783
    %2790 = vst [vmem:[#allocation2] sm:$0xff] %v2786
    %2791 = vst [vmem:[#allocation2 + $0x8] sm:$0xff] %v2787
    %2792 = vst [vmem:[#allocation2 + $0x10] sm:$0xff] %v2788
    %2793 = vst [vmem:[#allocation2 + $0x18] sm:$0xff] %v2789
    // Predicated region
    $region18: #{tpu_custom_call.1} parent=1 // pred_check
      _
    $region19: #{tpu_custom_call.1} parent=1 // pred_check_branch
      %2795 = sbr.rel (0) target = $region21
    $region20: #{tpu_custom_call.1} parent=1 // pred_region
      %s2797 = ssub.s32 512, 512
      %2798 = vsyncadd [#allocation3], %s2797
      %s2799 = sshll.u32 [#allocation2], 4
      %s2800 = int_to_ptr.vmem [resolvable:$true] %s2799
      %2805 = dma.vmem_to_hbm [thread:$0]  %s2800, 512, %s4, [#allocation3], 128, 128, 8
    $region21: #{tpu_custom_call.1} parent=1 // pred_fallthru
      _
    // Predicated region
    $region22: #{tpu_custom_call.1} parent=1 // pred_check
      _
    $region23: #{tpu_custom_call.1} parent=1 // pred_check_branch
      %2807 = sbr.rel (0) target = $region25
    $region24: #{tpu_custom_call.1} parent=1 // pred_region
      %2808 = dma.done [#allocation3], 512
    $region25: #{tpu_custom_call.1} parent=1 // pred_fallthru
      _
    %2809 = vsyncpa [#allocation3], 1

</llo_original>
